<compile_context>
chip_gen: v5e
topology: v5e:2x2
jax: 0.10.0
libtpu: 0.0.40
codegen_flags: <defaults>
</compile_context>

<pallas_src>
import math
import functools

import numpy as np
import jax
import jax.numpy as jnp
from jax import lax
from jax.experimental import pallas as pl
from jax.experimental.pallas import tpu as pltpu

EPS = 1e-5  # PyTorch nn.LayerNorm default


def _layernorm(x, g, b):
    mu = jnp.mean(x, axis=-1, keepdims=True)
    var = jnp.mean((x - mu) ** 2, axis=-1, keepdims=True)
    return (x - mu) * lax.rsqrt(var + EPS) * g + b


def _bdot(a, b):
    """MXU matmul: bf16 x bf16 inputs, f32 accumulation (native MXU rate)."""
    return jnp.dot(a, b, preferred_element_type=jnp.float32)


# ----------------------------------------------------------------------------
# Single fused Pallas kernel: all layers + final norm + head projection
# ----------------------------------------------------------------------------
def transformer_kernel(L, B, S, H,
                       x_ref, cos_ref, sin_ref, rot_ref,
                       g1_ref, b1_ref, wqkv_ref, bqkv_ref, wo_ref, bo_ref,
                       g2_ref, b2_ref, w1_ref, bf1_ref, w2_ref, bf2_ref,
                       gf_ref, bff_ref, wout_ref,
                       logits_ref):
    bf16 = jnp.bfloat16
    x = x_ref[...]                       # (B*S, E) f32, resident across layers
    BS, E = x.shape
    Dh = E // H
    inv_sqrt = 1.0 / math.sqrt(Dh)

    # --- causal mask, built once (bool mask promoted to +1.0, as in torch) ---
    rows = lax.broadcasted_iota(jnp.int32, (S, S), 0)
    cols = lax.broadcasted_iota(jnp.int32, (S, S), 1)
    mask = (cols > rows).astype(jnp.float32)[None]      # (1, S, S)

    # --- RoPE tables: (S,E) broadcast over batch once, inside the kernel ---
    cos = jnp.tile(cos_ref[...], (B, 1))                # (B*S, E)
    sin = jnp.tile(sin_ref[...], (B, 1))
    rot = rot_ref[...]                                  # (E, E) bf16, +-1/0

    for l in range(L):                                  # layers fused, unrolled
        # --- pre-norm (the reference REPLACES x with norm1(x)) ---
        xn = _layernorm(x, g1_ref[l], b1_ref[l])
        xb = xn.astype(bf16)

        # --- fused q/k/v projection: one (BS,E)x(E,3E) MXU matmul ---
        qkv = _bdot(xb, wqkv_ref[l]) + bqkv_ref[l]      # (BS, 3E) f32
        q = qkv[:, :E]
        k = qkv[:, E:2 * E]
        v = qkv[:, 2 * E:]

        # --- interleaved RoPE: rotate_half via one shared +-1 bf16 matmul ---
        # TODO(synk): for E % 128 == 0 use pltpu.roll (XLU) + sign flip.
        q = (q * cos + _bdot(q.astype(bf16), rot) * sin) * inv_sqrt
        k = k * cos + _bdot(k.astype(bf16), rot) * sin

        # --- attention: all B*H heads in ONE batched einsum ---
        # Head split = H static lane slices stacked on a new LEADING axis;
        # (H, B*S, Dh) -> (H*B, S, Dh) preserves element order (vreg reindex).
        qh = jnp.stack([q[:, h * Dh:(h + 1) * Dh] for h in range(H)], 0)
        kh = jnp.stack([k[:, h * Dh:(h + 1) * Dh] for h in range(H)], 0)
        vh = jnp.stack([v[:, h * Dh:(h + 1) * Dh] for h in range(H)], 0)
        qh = qh.reshape(H * B, S, Dh).astype(bf16)
        kh = kh.reshape(H * B, S, Dh).astype(bf16)
        vh = vh.reshape(H * B, S, Dh).astype(bf16)

        s = jnp.einsum("nqd,nkd->nqk", qh, kh,
                       preferred_element_type=jnp.float32) + mask   # (HB,S,S)
        s = s - jnp.max(s, axis=-1, keepdims=True)
        p = jnp.exp(s)
        p = p * pl.reciprocal(jnp.sum(p, axis=-1, keepdims=True), approx=True)
        o = jnp.einsum("nqk,nkd->nqd", p.astype(bf16), vh,
                       preferred_element_type=jnp.float32)          # (HB,S,Dh)

        # Back to (BS, E) in registers: no VMEM scratch, no masked scatters.
        o = o.reshape(H, BS, Dh)
        o = jnp.concatenate([o[h] for h in range(H)], axis=-1)      # (BS, E)

        a = _bdot(o.astype(bf16), wo_ref[l]) + bo_ref[l]

        # --- residual + norm2 + feedforward + residual ---
        y = _layernorm(xn + a, g2_ref[l], b2_ref[l])
        h1 = jnp.maximum(_bdot(y.astype(bf16), w1_ref[l]) + bf1_ref[l], 0.0)
        ff = _bdot(h1.astype(bf16), w2_ref[l]) + bf2_ref[l]
        x = y + ff

    # --- fused final LayerNorm + lane-padded (128-lane) output projection ---
    xf = _layernorm(x, gf_ref[...], bff_ref[...])
    logits_ref[...] = _bdot(xf.astype(bf16), wout_ref[...])


# ----------------------------------------------------------------------------
# RoPE tables (lucidrains RotaryEmbedding(dim = emb_dim // (2*H)) semantics)
# ----------------------------------------------------------------------------
def rope_tables(S, E, n_heads, theta=10000.0):
    """cos/sin tables (S, E) and block-diag rotate_half matrix (E, E)."""
    Dh = E // n_heads
    rdim = E // (2 * n_heads)
    inv_freq = 1.0 / (theta ** (np.arange(0, rdim, 2, dtype=np.float32) / rdim))
    t = np.arange(S, dtype=np.float32)
    freqs = np.einsum("s,f->sf", t, inv_freq)         # (S, rdim//2)
    freqs = np.repeat(freqs, 2, axis=-1)              # interleaved f0,f0,f1,f1,...
    cos_h = np.concatenate([np.cos(freqs), np.ones((S, Dh - rdim), np.float32)], -1)
    sin_h = np.concatenate([np.sin(freqs), np.zeros((S, Dh - rdim), np.float32)], -1)
    cos_f = np.tile(cos_h, (1, n_heads)).astype(np.float32)
    sin_f = np.tile(sin_h, (1, n_heads)).astype(np.float32)

    Rh = np.zeros((Dh, Dh), np.float32)
    for i in range(rdim // 2):
        Rh[2 * i + 1, 2 * i] = -1.0                   # out[2i]   = -x[2i+1]
        Rh[2 * i, 2 * i + 1] = 1.0                    # out[2i+1] =  x[2i]
    rot = np.kron(np.eye(n_heads, dtype=np.float32), Rh)
    return jnp.asarray(cos_f), jnp.asarray(sin_f), jnp.asarray(rot)


# ----------------------------------------------------------------------------
# Wrapper: embedding gather (glue) -> one fused pallas_call -> slice (glue)
# ----------------------------------------------------------------------------
def transformer_forward(tokens, params, n_heads):
    bf16 = jnp.bfloat16
    B = tokens.shape[0]
    tokens = tokens.reshape(B, -1)
    S = tokens.shape[1]
    x = jnp.take(params["emb"], tokens, axis=0).astype(jnp.float32)  # glue: gather
    E = x.shape[-1]
    x = x.reshape(B * S, E)

    cos_f, sin_f, rot = rope_tables(S, E, n_heads)
    rot_bf = rot.astype(bf16)                          # exact (+-1 / 0 entries)

    layers = params["layers"]
    L = len(layers)
    stack = lambda key: jnp.stack([lp[key] for lp in layers])
    g1, b1 = stack("g1"), stack("b1")
    wqkv = jnp.stack([jnp.concatenate([lp["wq"], lp["wk"], lp["wv"]], axis=1)
                      for lp in layers]).astype(bf16)                # (L, E, 3E)
    bqkv = jnp.stack([jnp.concatenate([lp["bq"], lp["bk"], lp["bv"]], axis=1)
                      for lp in layers])                             # (L, 1, 3E)
    wo, bo = stack("wo").astype(bf16), stack("bo")
    g2, b2 = stack("g2"), stack("b2")
    w1, bf1 = stack("w1").astype(bf16), stack("bf1")
    w2, bf2 = stack("w2").astype(bf16), stack("bf2")

    O = params["wout"].shape[1]
    O_pad = ((O + 127) // 128) * 128
    wout_pad = jnp.pad(params["wout"], ((0, 0), (0, O_pad - O))).astype(bf16)

    # 48 MiB scoped VMEM: plenty for this whole-slab design and still under
    # v7x's 64 MiB physical VMEM (v5e/v6e have 128 MiB headroom).
    cparams = pltpu.CompilerParams(vmem_limit_bytes=48 * 1024 * 1024)

    logits_pad = pl.pallas_call(
        functools.partial(transformer_kernel, L, B, S, n_heads),
        out_shape=jax.ShapeDtypeStruct((B * S, O_pad), jnp.float32),
        compiler_params=cparams,
    )(x, cos_f, sin_f, rot_bf,
      g1, b1, wqkv, bqkv, wo, bo, g2, b2, w1, bf1, w2, bf2,
      params["gf"], params["bf"], wout_pad)

    logits = logits_pad[:, :O]                         # glue: drop lane padding
    return logits.reshape(B, S, O)[:, -1, :]           # glue: last-token select


# ----------------------------------------------------------------------------
# Pure-JAX references (mirror the PyTorch forward) for validation
#   mxu_bf16=False: f32 HIGHEST ground truth
#   mxu_bf16=True : mirrors the kernel's bf16-input / f32-accumulate matmuls
# ----------------------------------------------------------------------------
def reference_forward(tokens, params, n_heads, mxu_bf16=False):
    if mxu_bf16:
        def dot(a, b):
            return jnp.matmul(a.astype(jnp.bfloat16), b.astype(jnp.bfloat16),
                              preferred_element_type=jnp.float32)
    else:
        def dot(a, b):
            return jnp.matmul(a, b, precision=lax.Precision.HIGHEST)

    B = tokens.shape[0]
    tokens = tokens.reshape(B, -1)
    S = tokens.shape[1]
    x = jnp.take(params["emb"], tokens, axis=0).astype(jnp.float32)
    E = x.shape[-1]
    Dh = E // n_heads
    mask = jnp.triu(jnp.ones((S, S), jnp.float32), k=1)   # bool mask -> +1.0
    cos_f, sin_f, rot = rope_tables(S, E, n_heads)
    for lp in params["layers"]:
        xn = _layernorm(x, lp["g1"][0], lp["b1"][0])
        q = dot(xn, lp["wq"]) + lp["bq"][0]
        k = dot(xn, lp["wk"]) + lp["bk"][0]
        v = dot(xn, lp["wv"]) + lp["bv"][0]
        q = q * cos_f + dot(q, rot) * sin_f
        k = k * cos_f + dot(k, rot) * sin_f
        q = q / math.sqrt(Dh)
        qh = q.reshape(B, S, n_heads, Dh).transpose(0, 2, 1, 3)
        kh = k.reshape(B, S, n_heads, Dh).transpose(0, 2, 1, 3)
        vh = v.reshape(B, S, n_heads, Dh).transpose(0, 2, 1, 3)
        s = dot(qh, kh.transpose(0, 1, 3, 2)) + mask
        p = jax.nn.softmax(s, axis=-1)
        o = dot(p, vh).transpose(0, 2, 1, 3).reshape(B, S, E)
        a = dot(o, lp["wo"]) + lp["bo"][0]
        y = _layernorm(xn + a, lp["g2"][0], lp["b2"][0])
        ff = dot(jnp.maximum(dot(y, lp["w1"]) + lp["bf1"][0], 0.0), lp["w2"]) + lp["bf2"][0]
        x = y + ff
    xf = _layernorm(x, params["gf"][0], params["bf"][0])
    return dot(xf, params["wout"])[:, -1]


# ----------------------------------------------------------------------------
# Deterministic parameter init (weights stored as (in, out), i.e. W^T of torch)
# ----------------------------------------------------------------------------
def init_params(key, vocab, E, O, n_layers, mlp_dim):
    keys = jax.random.split(key, 2 + n_layers)
    f32 = jnp.float32
    params = {
        "emb": jax.random.normal(keys[0], (vocab, E), f32),
        "wout": jax.random.normal(keys[1], (E, O), f32) / math.sqrt(E),
        "gf": jnp.ones((1, E), f32),
        "bf": jnp.zeros((1, E), f32),
        "layers": [],
    }
    for l in range(n_layers):
        lk = jax.random.split(keys[2 + l], 10)
        sc = 1.0 / math.sqrt(E)
        lp = dict(
            g1=jnp.ones((1, E), f32), b1=jnp.zeros((1, E), f32),
            wq=jax.random.normal(lk[0], (E, E), f32) * sc,
            bq=jax.random.normal(lk[1], (1, E), f32) * 0.02,
            wk=jax.random.normal(lk[2], (E, E), f32) * sc,
            bk=jax.random.normal(lk[3], (1, E), f32) * 0.02,
            wv=jax.random.normal(lk[4], (E, E), f32) * sc,
            bv=jax.random.normal(lk[5], (1, E), f32) * 0.02,
            wo=jax.random.normal(lk[6], (E, E), f32) * sc,
            bo=jnp.zeros((1, E), f32),
            g2=jnp.ones((1, E), f32), b2=jnp.zeros((1, E), f32),
            w1=jax.random.normal(lk[7], (E, mlp_dim), f32) * sc,
            bf1=jax.random.normal(lk[8], (1, mlp_dim), f32) * 0.02,
            w2=jax.random.normal(lk[9], (mlp_dim, E), f32) / math.sqrt(mlp_dim),
            bf2=jnp.zeros((1, E), f32),
        )
        params["layers"].append(lp)
    return params


if __name__ == "__main__":
    # Small config: emb_dim=32, output_dim=10, n_layers=2, n_heads=2, vocab=10
    B, S = 2, 8
    EMB, OUT, LAYERS, HEADS, VOCAB = 32, 10, 2, 2, 10
    MLP = 2 * EMB

    key = jax.random.PRNGKey(0)
    kp, kt = jax.random.split(key)
    params = init_params(kp, VOCAB, EMB, OUT, LAYERS, MLP)
    tokens = jax.random.randint(kt, (B, S), 0, VOCAB, dtype=jnp.int32)

    fwd = jax.jit(transformer_forward, static_argnums=(2,))
    out = fwd(tokens, params, HEADS)
    jax.block_until_ready(out)
    assert out.shape == (B, OUT)

    # Tight check: reference that mirrors the kernel's bf16-MXU precision.
    ref_bf16 = reference_forward(tokens, params, HEADS, mxu_bf16=True)
    np.testing.assert_allclose(np.asarray(out), np.asarray(ref_bf16),
                               rtol=2e-2, atol=2e-2)
    # Loose sanity check: full f32 (HIGHEST) reference of the PyTorch forward.
    ref_f32 = reference_forward(tokens, params, HEADS, mxu_bf16=False)
    np.testing.assert_allclose(np.asarray(out), np.asarray(ref_f32),
                               rtol=1e-1, atol=1e-1)

    print("KERNEL_OK")
</pallas_src>

<mosaic_0001>
module attributes {stable_mosaic.version = 11 : i64} {
  func.func @transformer_kernel(%arg0: memref<16x32xf32, #tpu.memory_space<vmem>>, %arg1: memref<8x32xf32, #tpu.memory_space<vmem>>, %arg2: memref<8x32xf32, #tpu.memory_space<vmem>>, %arg3: memref<32x32xbf16, #tpu.memory_space<vmem>>, %arg4: memref<2x1x32xf32, #tpu.memory_space<vmem>>, %arg5: memref<2x1x32xf32, #tpu.memory_space<vmem>>, %arg6: memref<2x32x96xbf16, #tpu.memory_space<vmem>>, %arg7: memref<2x1x96xf32, #tpu.memory_space<vmem>>, %arg8: memref<2x32x32xbf16, #tpu.memory_space<vmem>>, %arg9: memref<2x1x32xf32, #tpu.memory_space<vmem>>, %arg10: memref<2x1x32xf32, #tpu.memory_space<vmem>>, %arg11: memref<2x1x32xf32, #tpu.memory_space<vmem>>, %arg12: memref<2x32x64xbf16, #tpu.memory_space<vmem>>, %arg13: memref<2x1x64xf32, #tpu.memory_space<vmem>>, %arg14: memref<2x64x32xbf16, #tpu.memory_space<vmem>>, %arg15: memref<2x1x32xf32, #tpu.memory_space<vmem>>, %arg16: memref<1x32xf32, #tpu.memory_space<vmem>>, %arg17: memref<1x32xf32, #tpu.memory_space<vmem>>, %arg18: memref<32x128xbf16, #tpu.memory_space<vmem>>, %arg19: memref<16x128xf32, #tpu.memory_space<vmem>>) attributes {dimension_semantics = [], scalar_prefetch = 0 : i64, scratch_operands = 0 : i64, tpu.core_type = #tpu.core_type<tc>} {
    %c0 = arith.constant 0 : index
    %c0_0 = arith.constant 0 : index
    %0 = vector.load %arg0[%c0, %c0_0] : memref<16x32xf32, #tpu.memory_space<vmem>>, vector<16x32xf32>
    %1 = tpu.iota {dimensions = array<i32: 0>} : vector<8x8xi32>
    %2 = tpu.iota {dimensions = array<i32: 1>} : vector<8x8xi32>
    %3 = arith.cmpi sgt, %2, %1 : vector<8x8xi32>
    %4 = arith.extui %3 : vector<8x8xi1> to vector<8x8xi32>
    %5 = arith.sitofp %4 : vector<8x8xi32> to vector<8x8xf32>
    %6 = vector.shape_cast %5 : vector<8x8xf32> to vector<1x8x8xf32>
    %c0_1 = arith.constant 0 : index
    %c0_2 = arith.constant 0 : index
    %7 = vector.load %arg1[%c0_1, %c0_2] : memref<8x32xf32, #tpu.memory_space<vmem>>, vector<8x32xf32>
    %8 = tpu.concatenate %7, %7 in 0 : vector<8x32xf32>, vector<8x32xf32> -> vector<16x32xf32>
    %c0_3 = arith.constant 0 : index
    %c0_4 = arith.constant 0 : index
    %9 = vector.load %arg2[%c0_3, %c0_4] : memref<8x32xf32, #tpu.memory_space<vmem>>, vector<8x32xf32>
    %10 = tpu.concatenate %9, %9 in 0 : vector<8x32xf32>, vector<8x32xf32> -> vector<16x32xf32>
    %c0_5 = arith.constant 0 : index
    %c0_6 = arith.constant 0 : index
    %11 = vector.load %arg3[%c0_5, %c0_6] : memref<32x32xbf16, #tpu.memory_space<vmem>>, vector<32x32xbf16>
    %c0_7 = arith.constant 0 : index
    %c0_8 = arith.constant 0 : index
    %c0_9 = arith.constant 0 : index
    %12 = vector.load %arg4[%c0_7, %c0_8, %c0_9] : memref<2x1x32xf32, #tpu.memory_space<vmem>>, vector<1x1x32xf32>
    %13 = vector.shape_cast %12 : vector<1x1x32xf32> to vector<1x32xf32>
    %c0_10 = arith.constant 0 : index
    %c0_11 = arith.constant 0 : index
    %c0_12 = arith.constant 0 : index
    %14 = vector.load %arg5[%c0_10, %c0_11, %c0_12] : memref<2x1x32xf32, #tpu.memory_space<vmem>>, vector<1x1x32xf32>
    %15 = vector.shape_cast %14 : vector<1x1x32xf32> to vector<1x32xf32>
    %cst = arith.constant dense<0.000000e+00> : vector<16xf32>
    %16 = vector.multi_reduction <add>, %0, %cst [1] : vector<16x32xf32> to vector<16xf32>
    %17 = vector.shape_cast %16 : vector<16xf32> to vector<16x1xf32>
    %cst_13 = arith.constant 3.200000e+01 : f32
    %18 = vector.broadcast %cst_13 : f32 to vector<16x1xf32>
    %19 = arith.divf %17, %18 : vector<16x1xf32>
    %20 = vector.broadcast %19 : vector<16x1xf32> to vector<16x32xf32>
    %21 = arith.subf %0, %20 : vector<16x32xf32>
    %22 = arith.mulf %21, %21 : vector<16x32xf32>
    %cst_14 = arith.constant dense<0.000000e+00> : vector<16xf32>
    %23 = vector.multi_reduction <add>, %22, %cst_14 [1] : vector<16x32xf32> to vector<16xf32>
    %24 = vector.shape_cast %23 : vector<16xf32> to vector<16x1xf32>
    %cst_15 = arith.constant 3.200000e+01 : f32
    %25 = vector.broadcast %cst_15 : f32 to vector<16x1xf32>
    %26 = arith.divf %24, %25 : vector<16x1xf32>
    %27 = vector.broadcast %19 : vector<16x1xf32> to vector<16x32xf32>
    %28 = arith.subf %0, %27 : vector<16x32xf32>
    %cst_16 = arith.constant 9.99999974E-6 : f32
    %29 = vector.broadcast %cst_16 : f32 to vector<16x1xf32>
    %30 = arith.addf %26, %29 : vector<16x1xf32>
    %31 = math.rsqrt %30 : vector<16x1xf32>
    %32 = vector.broadcast %31 : vector<16x1xf32> to vector<16x32xf32>
    %33 = arith.mulf %28, %32 : vector<16x32xf32>
    %34 = vector.broadcast %13 : vector<1x32xf32> to vector<16x32xf32>
    %35 = arith.mulf %33, %34 : vector<16x32xf32>
    %36 = vector.broadcast %15 : vector<1x32xf32> to vector<16x32xf32>
    %37 = arith.addf %35, %36 : vector<16x32xf32>
    %38 = arith.truncf %37 : vector<16x32xf32> to vector<16x32xbf16>
    %c0_17 = arith.constant 0 : index
    %c0_18 = arith.constant 0 : index
    %c0_19 = arith.constant 0 : index
    %39 = vector.load %arg6[%c0_17, %c0_18, %c0_19] : memref<2x32x96xbf16, #tpu.memory_space<vmem>>, vector<1x32x96xbf16>
    %40 = vector.shape_cast %39 : vector<1x32x96xbf16> to vector<32x96xbf16>
    %cst_20 = arith.constant dense<0.000000e+00> : vector<16x96xf32>
    %41 = tpu.matmul %38, %40, %cst_20 {dimension_numbers = #tpu.dot_dimension_numbers<[1], [0], [0], [1], [0, 0, 1, 1], [], []>} : vector<16x32xbf16>, vector<32x96xbf16>, vector<16x96xf32> -> vector<16x96xf32>
    %c0_21 = arith.constant 0 : index
    %c0_22 = arith.constant 0 : index
    %c0_23 = arith.constant 0 : index
    %42 = vector.load %arg7[%c0_21, %c0_22, %c0_23] : memref<2x1x96xf32, #tpu.memory_space<vmem>>, vector<1x1x96xf32>
    %43 = vector.shape_cast %42 : vector<1x1x96xf32> to vector<1x96xf32>
    %44 = vector.broadcast %43 : vector<1x96xf32> to vector<16x96xf32>
    %45 = arith.addf %41, %44 : vector<16x96xf32>
    %46 = vector.extract_strided_slice %45 {offsets = [0, 0], sizes = [16, 32], strides = [1, 1]} : vector<16x96xf32> to vector<16x32xf32>
    %47 = vector.extract_strided_slice %45 {offsets = [0, 32], sizes = [16, 32], strides = [1, 1]} : vector<16x96xf32> to vector<16x32xf32>
    %48 = vector.extract_strided_slice %45 {offsets = [0, 64], sizes = [16, 32], strides = [1, 1]} : vector<16x96xf32> to vector<16x32xf32>
    %49 = arith.mulf %46, %8 : vector<16x32xf32>
    %50 = arith.truncf %46 : vector<16x32xf32> to vector<16x32xbf16>
    %cst_24 = arith.constant dense<0.000000e+00> : vector<16x32xf32>
    %51 = tpu.matmul %50, %11, %cst_24 {dimension_numbers = #tpu.dot_dimension_numbers<[1], [0], [0], [1], [0, 0, 1, 1], [], []>} : vector<16x32xbf16>, vector<32x32xbf16>, vector<16x32xf32> -> vector<16x32xf32>
    %52 = arith.mulf %51, %10 : vector<16x32xf32>
    %53 = arith.addf %49, %52 : vector<16x32xf32>
    %cst_25 = arith.constant 2.500000e-01 : f32
    %54 = vector.broadcast %cst_25 : f32 to vector<16x32xf32>
    %55 = arith.mulf %53, %54 : vector<16x32xf32>
    %56 = arith.mulf %47, %8 : vector<16x32xf32>
    %57 = arith.truncf %47 : vector<16x32xf32> to vector<16x32xbf16>
    %cst_26 = arith.constant dense<0.000000e+00> : vector<16x32xf32>
    %58 = tpu.matmul %57, %11, %cst_26 {dimension_numbers = #tpu.dot_dimension_numbers<[1], [0], [0], [1], [0, 0, 1, 1], [], []>} : vector<16x32xbf16>, vector<32x32xbf16>, vector<16x32xf32> -> vector<16x32xf32>
    %59 = arith.mulf %58, %10 : vector<16x32xf32>
    %60 = arith.addf %56, %59 : vector<16x32xf32>
    %61 = vector.extract_strided_slice %55 {offsets = [0, 0], sizes = [16, 16], strides = [1, 1]} : vector<16x32xf32> to vector<16x16xf32>
    %62 = vector.extract_strided_slice %55 {offsets = [0, 16], sizes = [16, 16], strides = [1, 1]} : vector<16x32xf32> to vector<16x16xf32>
    %63 = vector.shape_cast %61 : vector<16x16xf32> to vector<1x16x16xf32>
    %64 = vector.shape_cast %62 : vector<16x16xf32> to vector<1x16x16xf32>
    %65 = tpu.concatenate %63, %64 in 0 : vector<1x16x16xf32>, vector<1x16x16xf32> -> vector<2x16x16xf32>
    %66 = vector.extract_strided_slice %60 {offsets = [0, 0], sizes = [16, 16], strides = [1, 1]} : vector<16x32xf32> to vector<16x16xf32>
    %67 = vector.extract_strided_slice %60 {offsets = [0, 16], sizes = [16, 16], strides = [1, 1]} : vector<16x32xf32> to vector<16x16xf32>
    %68 = vector.shape_cast %66 : vector<16x16xf32> to vector<1x16x16xf32>
    %69 = vector.shape_cast %67 : vector<16x16xf32> to vector<1x16x16xf32>
    %70 = tpu.concatenate %68, %69 in 0 : vector<1x16x16xf32>, vector<1x16x16xf32> -> vector<2x16x16xf32>
    %71 = vector.extract_strided_slice %48 {offsets = [0, 0], sizes = [16, 16], strides = [1, 1]} : vector<16x32xf32> to vector<16x16xf32>
    %72 = vector.extract_strided_slice %48 {offsets = [0, 16], sizes = [16, 16], strides = [1, 1]} : vector<16x32xf32> to vector<16x16xf32>
    %73 = vector.shape_cast %71 : vector<16x16xf32> to vector<1x16x16xf32>
    %74 = vector.shape_cast %72 : vector<16x16xf32> to vector<1x16x16xf32>
    %75 = tpu.concatenate %73, %74 in 0 : vector<1x16x16xf32>, vector<1x16x16xf32> -> vector<2x16x16xf32>
    %76 = vector.shape_cast %65 : vector<2x16x16xf32> to vector<4x8x16xf32>
    %77 = arith.truncf %76 : vector<4x8x16xf32> to vector<4x8x16xbf16>
    %78 = vector.shape_cast %70 : vector<2x16x16xf32> to vector<4x8x16xf32>
    %79 = arith.truncf %78 : vector<4x8x16xf32> to vector<4x8x16xbf16>
    %80 = vector.shape_cast %75 : vector<2x16x16xf32> to vector<4x8x16xf32>
    %81 = arith.truncf %80 : vector<4x8x16xf32> to vector<4x8x16xbf16>
    "tpu.trace_start"() <{level = 10 : i32, message = "nqd,nkd->nqk"}> : () -> ()
    %cst_27 = arith.constant dense<0.000000e+00> : vector<4x8x8xf32>
    %82 = tpu.matmul %77, %79, %cst_27 {dimension_numbers = #tpu.dot_dimension_numbers<[2], [2], [1], [1], [0, 0, 0, 1, 1, 1], [0], [0]>} : vector<4x8x16xbf16>, vector<4x8x16xbf16>, vector<4x8x8xf32> -> vector<4x8x8xf32>
    "tpu.trace_stop"() : () -> ()
    %83 = vector.broadcast %6 : vector<1x8x8xf32> to vector<4x8x8xf32>
    %84 = arith.addf %82, %83 : vector<4x8x8xf32>
    %cst_28 = arith.constant dense<0xFF800000> : vector<4x8xf32>
    %85 = vector.multi_reduction <maximumf>, %84, %cst_28 [2] : vector<4x8x8xf32> to vector<4x8xf32>
    %86 = vector.shape_cast %85 : vector<4x8xf32> to vector<4x8x1xf32>
    %87 = vector.broadcast %86 : vector<4x8x1xf32> to vector<4x8x8xf32>
    %88 = arith.subf %84, %87 : vector<4x8x8xf32>
    %89 = math.exp %88 : vector<4x8x8xf32>
    %cst_29 = arith.constant dense<0.000000e+00> : vector<4x8xf32>
    %90 = vector.multi_reduction <add>, %89, %cst_29 [2] : vector<4x8x8xf32> to vector<4x8xf32>
    %91 = vector.shape_cast %90 : vector<4x8xf32> to vector<4x8x1xf32>
    %92 = tpu.reciprocal %91 {approx = true} : vector<4x8x1xf32> -> vector<4x8x1xf32>
    %93 = vector.broadcast %92 : vector<4x8x1xf32> to vector<4x8x8xf32>
    %94 = arith.mulf %89, %93 : vector<4x8x8xf32>
    %95 = arith.truncf %94 : vector<4x8x8xf32> to vector<4x8x8xbf16>
    "tpu.trace_start"() <{level = 10 : i32, message = "nqk,nkd->nqd"}> : () -> ()
    %cst_30 = arith.constant dense<0.000000e+00> : vector<4x8x16xf32>
    %96 = tpu.matmul %95, %81, %cst_30 {dimension_numbers = #tpu.dot_dimension_numbers<[2], [1], [1], [2], [0, 0, 0, 1, 1, 2], [0], [0]>} : vector<4x8x8xbf16>, vector<4x8x16xbf16>, vector<4x8x16xf32> -> vector<4x8x16xf32>
    "tpu.trace_stop"() : () -> ()
    %97 = vector.shape_cast %96 : vector<4x8x16xf32> to vector<2x16x16xf32>
    %98 = vector.extract_strided_slice %97 {offsets = [0, 0, 0], sizes = [1, 16, 16], strides = [1, 1, 1]} : vector<2x16x16xf32> to vector<1x16x16xf32>
    %99 = vector.shape_cast %98 : vector<1x16x16xf32> to vector<16x16xf32>
    %100 = vector.extract_strided_slice %97 {offsets = [1, 0, 0], sizes = [1, 16, 16], strides = [1, 1, 1]} : vector<2x16x16xf32> to vector<1x16x16xf32>
    %101 = vector.shape_cast %100 : vector<1x16x16xf32> to vector<16x16xf32>
    %102 = tpu.concatenate %99, %101 in 1 : vector<16x16xf32>, vector<16x16xf32> -> vector<16x32xf32>
    %103 = arith.truncf %102 : vector<16x32xf32> to vector<16x32xbf16>
    %c0_31 = arith.constant 0 : index
    %c0_32 = arith.constant 0 : index
    %c0_33 = arith.constant 0 : index
    %104 = vector.load %arg8[%c0_31, %c0_32, %c0_33] : memref<2x32x32xbf16, #tpu.memory_space<vmem>>, vector<1x32x32xbf16>
    %105 = vector.shape_cast %104 : vector<1x32x32xbf16> to vector<32x32xbf16>
    %cst_34 = arith.constant dense<0.000000e+00> : vector<16x32xf32>
    %106 = tpu.matmul %103, %105, %cst_34 {dimension_numbers = #tpu.dot_dimension_numbers<[1], [0], [0], [1], [0, 0, 1, 1], [], []>} : vector<16x32xbf16>, vector<32x32xbf16>, vector<16x32xf32> -> vector<16x32xf32>
    %c0_35 = arith.constant 0 : index
    %c0_36 = arith.constant 0 : index
    %c0_37 = arith.constant 0 : index
    %107 = vector.load %arg9[%c0_35, %c0_36, %c0_37] : memref<2x1x32xf32, #tpu.memory_space<vmem>>, vector<1x1x32xf32>
    %108 = vector.shape_cast %107 : vector<1x1x32xf32> to vector<1x32xf32>
    %109 = vector.broadcast %108 : vector<1x32xf32> to vector<16x32xf32>
    %110 = arith.addf %106, %109 : vector<16x32xf32>
    %111 = arith.addf %37, %110 : vector<16x32xf32>
    %c0_38 = arith.constant 0 : index
    %c0_39 = arith.constant 0 : index
    %c0_40 = arith.constant 0 : index
    %112 = vector.load %arg10[%c0_38, %c0_39, %c0_40] : memref<2x1x32xf32, #tpu.memory_space<vmem>>, vector<1x1x32xf32>
    %113 = vector.shape_cast %112 : vector<1x1x32xf32> to vector<1x32xf32>
    %c0_41 = arith.constant 0 : index
    %c0_42 = arith.constant 0 : index
    %c0_43 = arith.constant 0 : index
    %114 = vector.load %arg11[%c0_41, %c0_42, %c0_43] : memref<2x1x32xf32, #tpu.memory_space<vmem>>, vector<1x1x32xf32>
    %115 = vector.shape_cast %114 : vector<1x1x32xf32> to vector<1x32xf32>
    %cst_44 = arith.constant dense<0.000000e+00> : vector<16xf32>
    %116 = vector.multi_reduction <add>, %111, %cst_44 [1] : vector<16x32xf32> to vector<16xf32>
    %117 = vector.shape_cast %116 : vector<16xf32> to vector<16x1xf32>
    %cst_45 = arith.constant 3.200000e+01 : f32
    %118 = vector.broadcast %cst_45 : f32 to vector<16x1xf32>
    %119 = arith.divf %117, %118 : vector<16x1xf32>
    %120 = vector.broadcast %119 : vector<16x1xf32> to vector<16x32xf32>
    %121 = arith.subf %111, %120 : vector<16x32xf32>
    %122 = arith.mulf %121, %121 : vector<16x32xf32>
    %cst_46 = arith.constant dense<0.000000e+00> : vector<16xf32>
    %123 = vector.multi_reduction <add>, %122, %cst_46 [1] : vector<16x32xf32> to vector<16xf32>
    %124 = vector.shape_cast %123 : vector<16xf32> to vector<16x1xf32>
    %cst_47 = arith.constant 3.200000e+01 : f32
    %125 = vector.broadcast %cst_47 : f32 to vector<16x1xf32>
    %126 = arith.divf %124, %125 : vector<16x1xf32>
    %127 = vector.broadcast %119 : vector<16x1xf32> to vector<16x32xf32>
    %128 = arith.subf %111, %127 : vector<16x32xf32>
    %cst_48 = arith.constant 9.99999974E-6 : f32
    %129 = vector.broadcast %cst_48 : f32 to vector<16x1xf32>
    %130 = arith.addf %126, %129 : vector<16x1xf32>
    %131 = math.rsqrt %130 : vector<16x1xf32>
    %132 = vector.broadcast %131 : vector<16x1xf32> to vector<16x32xf32>
    %133 = arith.mulf %128, %132 : vector<16x32xf32>
    %134 = vector.broadcast %113 : vector<1x32xf32> to vector<16x32xf32>
    %135 = arith.mulf %133, %134 : vector<16x32xf32>
    %136 = vector.broadcast %115 : vector<1x32xf32> to vector<16x32xf32>
    %137 = arith.addf %135, %136 : vector<16x32xf32>
    %138 = arith.truncf %137 : vector<16x32xf32> to vector<16x32xbf16>
    %c0_49 = arith.constant 0 : index
    %c0_50 = arith.constant 0 : index
    %c0_51 = arith.constant 0 : index
    %139 = vector.load %arg12[%c0_49, %c0_50, %c0_51] : memref<2x32x64xbf16, #tpu.memory_space<vmem>>, vector<1x32x64xbf16>
    %140 = vector.shape_cast %139 : vector<1x32x64xbf16> to vector<32x64xbf16>
    %cst_52 = arith.constant dense<0.000000e+00> : vector<16x64xf32>
    %141 = tpu.matmul %138, %140, %cst_52 {dimension_numbers = #tpu.dot_dimension_numbers<[1], [0], [0], [1], [0, 0, 1, 1], [], []>} : vector<16x32xbf16>, vector<32x64xbf16>, vector<16x64xf32> -> vector<16x64xf32>
    %c0_53 = arith.constant 0 : index
    %c0_54 = arith.constant 0 : index
    %c0_55 = arith.constant 0 : index
    %142 = vector.load %arg13[%c0_53, %c0_54, %c0_55] : memref<2x1x64xf32, #tpu.memory_space<vmem>>, vector<1x1x64xf32>
    %143 = vector.shape_cast %142 : vector<1x1x64xf32> to vector<1x64xf32>
    %144 = vector.broadcast %143 : vector<1x64xf32> to vector<16x64xf32>
    %145 = arith.addf %141, %144 : vector<16x64xf32>
    %cst_56 = arith.constant 0.000000e+00 : f32
    %146 = vector.broadcast %cst_56 : f32 to vector<16x64xf32>
    %147 = arith.maximumf %145, %146 : vector<16x64xf32>
    %148 = arith.truncf %147 : vector<16x64xf32> to vector<16x64xbf16>
    %c0_57 = arith.constant 0 : index
    %c0_58 = arith.constant 0 : index
    %c0_59 = arith.constant 0 : index
    %149 = vector.load %arg14[%c0_57, %c0_58, %c0_59] : memref<2x64x32xbf16, #tpu.memory_space<vmem>>, vector<1x64x32xbf16>
    %150 = vector.shape_cast %149 : vector<1x64x32xbf16> to vector<64x32xbf16>
    %cst_60 = arith.constant dense<0.000000e+00> : vector<16x32xf32>
    %151 = tpu.matmul %148, %150, %cst_60 {dimension_numbers = #tpu.dot_dimension_numbers<[1], [0], [0], [1], [0, 0, 1, 1], [], []>} : vector<16x64xbf16>, vector<64x32xbf16>, vector<16x32xf32> -> vector<16x32xf32>
    %c0_61 = arith.constant 0 : index
    %c0_62 = arith.constant 0 : index
    %c0_63 = arith.constant 0 : index
    %152 = vector.load %arg15[%c0_61, %c0_62, %c0_63] : memref<2x1x32xf32, #tpu.memory_space<vmem>>, vector<1x1x32xf32>
    %153 = vector.shape_cast %152 : vector<1x1x32xf32> to vector<1x32xf32>
    %154 = vector.broadcast %153 : vector<1x32xf32> to vector<16x32xf32>
    %155 = arith.addf %151, %154 : vector<16x32xf32>
    %156 = arith.addf %137, %155 : vector<16x32xf32>
    %c1 = arith.constant 1 : index
    %c0_64 = arith.constant 0 : index
    %c0_65 = arith.constant 0 : index
    %157 = vector.load %arg4[%c1, %c0_64, %c0_65] : memref<2x1x32xf32, #tpu.memory_space<vmem>>, vector<1x1x32xf32>
    %158 = vector.shape_cast %157 : vector<1x1x32xf32> to vector<1x32xf32>
    %c1_66 = arith.constant 1 : index
    %c0_67 = arith.constant 0 : index
    %c0_68 = arith.constant 0 : index
    %159 = vector.load %arg5[%c1_66, %c0_67, %c0_68] : memref<2x1x32xf32, #tpu.memory_space<vmem>>, vector<1x1x32xf32>
    %160 = vector.shape_cast %159 : vector<1x1x32xf32> to vector<1x32xf32>
    %cst_69 = arith.constant dense<0.000000e+00> : vector<16xf32>
    %161 = vector.multi_reduction <add>, %156, %cst_69 [1] : vector<16x32xf32> to vector<16xf32>
    %162 = vector.shape_cast %161 : vector<16xf32> to vector<16x1xf32>
    %cst_70 = arith.constant 3.200000e+01 : f32
    %163 = vector.broadcast %cst_70 : f32 to vector<16x1xf32>
    %164 = arith.divf %162, %163 : vector<16x1xf32>
    %165 = vector.broadcast %164 : vector<16x1xf32> to vector<16x32xf32>
    %166 = arith.subf %156, %165 : vector<16x32xf32>
    %167 = arith.mulf %166, %166 : vector<16x32xf32>
    %cst_71 = arith.constant dense<0.000000e+00> : vector<16xf32>
    %168 = vector.multi_reduction <add>, %167, %cst_71 [1] : vector<16x32xf32> to vector<16xf32>
    %169 = vector.shape_cast %168 : vector<16xf32> to vector<16x1xf32>
    %cst_72 = arith.constant 3.200000e+01 : f32
    %170 = vector.broadcast %cst_72 : f32 to vector<16x1xf32>
    %171 = arith.divf %169, %170 : vector<16x1xf32>
    %172 = vector.broadcast %164 : vector<16x1xf32> to vector<16x32xf32>
    %173 = arith.subf %156, %172 : vector<16x32xf32>
    %cst_73 = arith.constant 9.99999974E-6 : f32
    %174 = vector.broadcast %cst_73 : f32 to vector<16x1xf32>
    %175 = arith.addf %171, %174 : vector<16x1xf32>
    %176 = math.rsqrt %175 : vector<16x1xf32>
    %177 = vector.broadcast %176 : vector<16x1xf32> to vector<16x32xf32>
    %178 = arith.mulf %173, %177 : vector<16x32xf32>
    %179 = vector.broadcast %158 : vector<1x32xf32> to vector<16x32xf32>
    %180 = arith.mulf %178, %179 : vector<16x32xf32>
    %181 = vector.broadcast %160 : vector<1x32xf32> to vector<16x32xf32>
    %182 = arith.addf %180, %181 : vector<16x32xf32>
    %183 = arith.truncf %182 : vector<16x32xf32> to vector<16x32xbf16>
    %c1_74 = arith.constant 1 : index
    %c0_75 = arith.constant 0 : index
    %c0_76 = arith.constant 0 : index
    %184 = vector.load %arg6[%c1_74, %c0_75, %c0_76] : memref<2x32x96xbf16, #tpu.memory_space<vmem>>, vector<1x32x96xbf16>
    %185 = vector.shape_cast %184 : vector<1x32x96xbf16> to vector<32x96xbf16>
    %cst_77 = arith.constant dense<0.000000e+00> : vector<16x96xf32>
    %186 = tpu.matmul %183, %185, %cst_77 {dimension_numbers = #tpu.dot_dimension_numbers<[1], [0], [0], [1], [0, 0, 1, 1], [], []>} : vector<16x32xbf16>, vector<32x96xbf16>, vector<16x96xf32> -> vector<16x96xf32>
    %c1_78 = arith.constant 1 : index
    %c0_79 = arith.constant 0 : index
    %c0_80 = arith.constant 0 : index
    %187 = vector.load %arg7[%c1_78, %c0_79, %c0_80] : memref<2x1x96xf32, #tpu.memory_space<vmem>>, vector<1x1x96xf32>
    %188 = vector.shape_cast %187 : vector<1x1x96xf32> to vector<1x96xf32>
    %189 = vector.broadcast %188 : vector<1x96xf32> to vector<16x96xf32>
    %190 = arith.addf %186, %189 : vector<16x96xf32>
    %191 = vector.extract_strided_slice %190 {offsets = [0, 0], sizes = [16, 32], strides = [1, 1]} : vector<16x96xf32> to vector<16x32xf32>
    %192 = vector.extract_strided_slice %190 {offsets = [0, 32], sizes = [16, 32], strides = [1, 1]} : vector<16x96xf32> to vector<16x32xf32>
    %193 = vector.extract_strided_slice %190 {offsets = [0, 64], sizes = [16, 32], strides = [1, 1]} : vector<16x96xf32> to vector<16x32xf32>
    %194 = arith.mulf %191, %8 : vector<16x32xf32>
    %195 = arith.truncf %191 : vector<16x32xf32> to vector<16x32xbf16>
    %cst_81 = arith.constant dense<0.000000e+00> : vector<16x32xf32>
    %196 = tpu.matmul %195, %11, %cst_81 {dimension_numbers = #tpu.dot_dimension_numbers<[1], [0], [0], [1], [0, 0, 1, 1], [], []>} : vector<16x32xbf16>, vector<32x32xbf16>, vector<16x32xf32> -> vector<16x32xf32>
    %197 = arith.mulf %196, %10 : vector<16x32xf32>
    %198 = arith.addf %194, %197 : vector<16x32xf32>
    %cst_82 = arith.constant 2.500000e-01 : f32
    %199 = vector.broadcast %cst_82 : f32 to vector<16x32xf32>
    %200 = arith.mulf %198, %199 : vector<16x32xf32>
    %201 = arith.mulf %192, %8 : vector<16x32xf32>
    %202 = arith.truncf %192 : vector<16x32xf32> to vector<16x32xbf16>
    %cst_83 = arith.constant dense<0.000000e+00> : vector<16x32xf32>
    %203 = tpu.matmul %202, %11, %cst_83 {dimension_numbers = #tpu.dot_dimension_numbers<[1], [0], [0], [1], [0, 0, 1, 1], [], []>} : vector<16x32xbf16>, vector<32x32xbf16>, vector<16x32xf32> -> vector<16x32xf32>
    %204 = arith.mulf %203, %10 : vector<16x32xf32>
    %205 = arith.addf %201, %204 : vector<16x32xf32>
    %206 = vector.extract_strided_slice %200 {offsets = [0, 0], sizes = [16, 16], strides = [1, 1]} : vector<16x32xf32> to vector<16x16xf32>
    %207 = vector.extract_strided_slice %200 {offsets = [0, 16], sizes = [16, 16], strides = [1, 1]} : vector<16x32xf32> to vector<16x16xf32>
    %208 = vector.shape_cast %206 : vector<16x16xf32> to vector<1x16x16xf32>
    %209 = vector.shape_cast %207 : vector<16x16xf32> to vector<1x16x16xf32>
    %210 = tpu.concatenate %208, %209 in 0 : vector<1x16x16xf32>, vector<1x16x16xf32> -> vector<2x16x16xf32>
    %211 = vector.extract_strided_slice %205 {offsets = [0, 0], sizes = [16, 16], strides = [1, 1]} : vector<16x32xf32> to vector<16x16xf32>
    %212 = vector.extract_strided_slice %205 {offsets = [0, 16], sizes = [16, 16], strides = [1, 1]} : vector<16x32xf32> to vector<16x16xf32>
    %213 = vector.shape_cast %211 : vector<16x16xf32> to vector<1x16x16xf32>
    %214 = vector.shape_cast %212 : vector<16x16xf32> to vector<1x16x16xf32>
    %215 = tpu.concatenate %213, %214 in 0 : vector<1x16x16xf32>, vector<1x16x16xf32> -> vector<2x16x16xf32>
    %216 = vector.extract_strided_slice %193 {offsets = [0, 0], sizes = [16, 16], strides = [1, 1]} : vector<16x32xf32> to vector<16x16xf32>
    %217 = vector.extract_strided_slice %193 {offsets = [0, 16], sizes = [16, 16], strides = [1, 1]} : vector<16x32xf32> to vector<16x16xf32>
    %218 = vector.shape_cast %216 : vector<16x16xf32> to vector<1x16x16xf32>
    %219 = vector.shape_cast %217 : vector<16x16xf32> to vector<1x16x16xf32>
    %220 = tpu.concatenate %218, %219 in 0 : vector<1x16x16xf32>, vector<1x16x16xf32> -> vector<2x16x16xf32>
    %221 = vector.shape_cast %210 : vector<2x16x16xf32> to vector<4x8x16xf32>
    %222 = arith.truncf %221 : vector<4x8x16xf32> to vector<4x8x16xbf16>
    %223 = vector.shape_cast %215 : vector<2x16x16xf32> to vector<4x8x16xf32>
    %224 = arith.truncf %223 : vector<4x8x16xf32> to vector<4x8x16xbf16>
    %225 = vector.shape_cast %220 : vector<2x16x16xf32> to vector<4x8x16xf32>
    %226 = arith.truncf %225 : vector<4x8x16xf32> to vector<4x8x16xbf16>
    "tpu.trace_start"() <{level = 10 : i32, message = "nqd,nkd->nqk"}> : () -> ()
    %cst_84 = arith.constant dense<0.000000e+00> : vector<4x8x8xf32>
    %227 = tpu.matmul %222, %224, %cst_84 {dimension_numbers = #tpu.dot_dimension_numbers<[2], [2], [1], [1], [0, 0, 0, 1, 1, 1], [0], [0]>} : vector<4x8x16xbf16>, vector<4x8x16xbf16>, vector<4x8x8xf32> -> vector<4x8x8xf32>
    "tpu.trace_stop"() : () -> ()
    %228 = vector.broadcast %6 : vector<1x8x8xf32> to vector<4x8x8xf32>
    %229 = arith.addf %227, %228 : vector<4x8x8xf32>
    %cst_85 = arith.constant dense<0xFF800000> : vector<4x8xf32>
    %230 = vector.multi_reduction <maximumf>, %229, %cst_85 [2] : vector<4x8x8xf32> to vector<4x8xf32>
    %231 = vector.shape_cast %230 : vector<4x8xf32> to vector<4x8x1xf32>
    %232 = vector.broadcast %231 : vector<4x8x1xf32> to vector<4x8x8xf32>
    %233 = arith.subf %229, %232 : vector<4x8x8xf32>
    %234 = math.exp %233 : vector<4x8x8xf32>
    %cst_86 = arith.constant dense<0.000000e+00> : vector<4x8xf32>
    %235 = vector.multi_reduction <add>, %234, %cst_86 [2] : vector<4x8x8xf32> to vector<4x8xf32>
    %236 = vector.shape_cast %235 : vector<4x8xf32> to vector<4x8x1xf32>
    %237 = tpu.reciprocal %236 {approx = true} : vector<4x8x1xf32> -> vector<4x8x1xf32>
    %238 = vector.broadcast %237 : vector<4x8x1xf32> to vector<4x8x8xf32>
    %239 = arith.mulf %234, %238 : vector<4x8x8xf32>
    %240 = arith.truncf %239 : vector<4x8x8xf32> to vector<4x8x8xbf16>
    "tpu.trace_start"() <{level = 10 : i32, message = "nqk,nkd->nqd"}> : () -> ()
    %cst_87 = arith.constant dense<0.000000e+00> : vector<4x8x16xf32>
    %241 = tpu.matmul %240, %226, %cst_87 {dimension_numbers = #tpu.dot_dimension_numbers<[2], [1], [1], [2], [0, 0, 0, 1, 1, 2], [0], [0]>} : vector<4x8x8xbf16>, vector<4x8x16xbf16>, vector<4x8x16xf32> -> vector<4x8x16xf32>
    "tpu.trace_stop"() : () -> ()
    %242 = vector.shape_cast %241 : vector<4x8x16xf32> to vector<2x16x16xf32>
    %243 = vector.extract_strided_slice %242 {offsets = [0, 0, 0], sizes = [1, 16, 16], strides = [1, 1, 1]} : vector<2x16x16xf32> to vector<1x16x16xf32>
    %244 = vector.shape_cast %243 : vector<1x16x16xf32> to vector<16x16xf32>
    %245 = vector.extract_strided_slice %242 {offsets = [1, 0, 0], sizes = [1, 16, 16], strides = [1, 1, 1]} : vector<2x16x16xf32> to vector<1x16x16xf32>
    %246 = vector.shape_cast %245 : vector<1x16x16xf32> to vector<16x16xf32>
    %247 = tpu.concatenate %244, %246 in 1 : vector<16x16xf32>, vector<16x16xf32> -> vector<16x32xf32>
    %248 = arith.truncf %247 : vector<16x32xf32> to vector<16x32xbf16>
    %c1_88 = arith.constant 1 : index
    %c0_89 = arith.constant 0 : index
    %c0_90 = arith.constant 0 : index
    %249 = vector.load %arg8[%c1_88, %c0_89, %c0_90] : memref<2x32x32xbf16, #tpu.memory_space<vmem>>, vector<1x32x32xbf16>
    %250 = vector.shape_cast %249 : vector<1x32x32xbf16> to vector<32x32xbf16>
    %cst_91 = arith.constant dense<0.000000e+00> : vector<16x32xf32>
    %251 = tpu.matmul %248, %250, %cst_91 {dimension_numbers = #tpu.dot_dimension_numbers<[1], [0], [0], [1], [0, 0, 1, 1], [], []>} : vector<16x32xbf16>, vector<32x32xbf16>, vector<16x32xf32> -> vector<16x32xf32>
    %c1_92 = arith.constant 1 : index
    %c0_93 = arith.constant 0 : index
    %c0_94 = arith.constant 0 : index
    %252 = vector.load %arg9[%c1_92, %c0_93, %c0_94] : memref<2x1x32xf32, #tpu.memory_space<vmem>>, vector<1x1x32xf32>
    %253 = vector.shape_cast %252 : vector<1x1x32xf32> to vector<1x32xf32>
    %254 = vector.broadcast %253 : vector<1x32xf32> to vector<16x32xf32>
    %255 = arith.addf %251, %254 : vector<16x32xf32>
    %256 = arith.addf %182, %255 : vector<16x32xf32>
    %c1_95 = arith.constant 1 : index
    %c0_96 = arith.constant 0 : index
    %c0_97 = arith.constant 0 : index
    %257 = vector.load %arg10[%c1_95, %c0_96, %c0_97] : memref<2x1x32xf32, #tpu.memory_space<vmem>>, vector<1x1x32xf32>
    %258 = vector.shape_cast %257 : vector<1x1x32xf32> to vector<1x32xf32>
    %c1_98 = arith.constant 1 : index
    %c0_99 = arith.constant 0 : index
    %c0_100 = arith.constant 0 : index
    %259 = vector.load %arg11[%c1_98, %c0_99, %c0_100] : memref<2x1x32xf32, #tpu.memory_space<vmem>>, vector<1x1x32xf32>
    %260 = vector.shape_cast %259 : vector<1x1x32xf32> to vector<1x32xf32>
    %cst_101 = arith.constant dense<0.000000e+00> : vector<16xf32>
    %261 = vector.multi_reduction <add>, %256, %cst_101 [1] : vector<16x32xf32> to vector<16xf32>
    %262 = vector.shape_cast %261 : vector<16xf32> to vector<16x1xf32>
    %cst_102 = arith.constant 3.200000e+01 : f32
    %263 = vector.broadcast %cst_102 : f32 to vector<16x1xf32>
    %264 = arith.divf %262, %263 : vector<16x1xf32>
    %265 = vector.broadcast %264 : vector<16x1xf32> to vector<16x32xf32>
    %266 = arith.subf %256, %265 : vector<16x32xf32>
    %267 = arith.mulf %266, %266 : vector<16x32xf32>
    %cst_103 = arith.constant dense<0.000000e+00> : vector<16xf32>
    %268 = vector.multi_reduction <add>, %267, %cst_103 [1] : vector<16x32xf32> to vector<16xf32>
    %269 = vector.shape_cast %268 : vector<16xf32> to vector<16x1xf32>
    %cst_104 = arith.constant 3.200000e+01 : f32
    %270 = vector.broadcast %cst_104 : f32 to vector<16x1xf32>
    %271 = arith.divf %269, %270 : vector<16x1xf32>
    %272 = vector.broadcast %264 : vector<16x1xf32> to vector<16x32xf32>
    %273 = arith.subf %256, %272 : vector<16x32xf32>
    %cst_105 = arith.constant 9.99999974E-6 : f32
    %274 = vector.broadcast %cst_105 : f32 to vector<16x1xf32>
    %275 = arith.addf %271, %274 : vector<16x1xf32>
    %276 = math.rsqrt %275 : vector<16x1xf32>
    %277 = vector.broadcast %276 : vector<16x1xf32> to vector<16x32xf32>
    %278 = arith.mulf %273, %277 : vector<16x32xf32>
    %279 = vector.broadcast %258 : vector<1x32xf32> to vector<16x32xf32>
    %280 = arith.mulf %278, %279 : vector<16x32xf32>
    %281 = vector.broadcast %260 : vector<1x32xf32> to vector<16x32xf32>
    %282 = arith.addf %280, %281 : vector<16x32xf32>
    %283 = arith.truncf %282 : vector<16x32xf32> to vector<16x32xbf16>
    %c1_106 = arith.constant 1 : index
    %c0_107 = arith.constant 0 : index
    %c0_108 = arith.constant 0 : index
    %284 = vector.load %arg12[%c1_106, %c0_107, %c0_108] : memref<2x32x64xbf16, #tpu.memory_space<vmem>>, vector<1x32x64xbf16>
    %285 = vector.shape_cast %284 : vector<1x32x64xbf16> to vector<32x64xbf16>
    %cst_109 = arith.constant dense<0.000000e+00> : vector<16x64xf32>
    %286 = tpu.matmul %283, %285, %cst_109 {dimension_numbers = #tpu.dot_dimension_numbers<[1], [0], [0], [1], [0, 0, 1, 1], [], []>} : vector<16x32xbf16>, vector<32x64xbf16>, vector<16x64xf32> -> vector<16x64xf32>
    %c1_110 = arith.constant 1 : index
    %c0_111 = arith.constant 0 : index
    %c0_112 = arith.constant 0 : index
    %287 = vector.load %arg13[%c1_110, %c0_111, %c0_112] : memref<2x1x64xf32, #tpu.memory_space<vmem>>, vector<1x1x64xf32>
    %288 = vector.shape_cast %287 : vector<1x1x64xf32> to vector<1x64xf32>
    %289 = vector.broadcast %288 : vector<1x64xf32> to vector<16x64xf32>
    %290 = arith.addf %286, %289 : vector<16x64xf32>
    %cst_113 = arith.constant 0.000000e+00 : f32
    %291 = vector.broadcast %cst_113 : f32 to vector<16x64xf32>
    %292 = arith.maximumf %290, %291 : vector<16x64xf32>
    %293 = arith.truncf %292 : vector<16x64xf32> to vector<16x64xbf16>
    %c1_114 = arith.constant 1 : index
    %c0_115 = arith.constant 0 : index
    %c0_116 = arith.constant 0 : index
    %294 = vector.load %arg14[%c1_114, %c0_115, %c0_116] : memref<2x64x32xbf16, #tpu.memory_space<vmem>>, vector<1x64x32xbf16>
    %295 = vector.shape_cast %294 : vector<1x64x32xbf16> to vector<64x32xbf16>
    %cst_117 = arith.constant dense<0.000000e+00> : vector<16x32xf32>
    %296 = tpu.matmul %293, %295, %cst_117 {dimension_numbers = #tpu.dot_dimension_numbers<[1], [0], [0], [1], [0, 0, 1, 1], [], []>} : vector<16x64xbf16>, vector<64x32xbf16>, vector<16x32xf32> -> vector<16x32xf32>
    %c1_118 = arith.constant 1 : index
    %c0_119 = arith.constant 0 : index
    %c0_120 = arith.constant 0 : index
    %297 = vector.load %arg15[%c1_118, %c0_119, %c0_120] : memref<2x1x32xf32, #tpu.memory_space<vmem>>, vector<1x1x32xf32>
    %298 = vector.shape_cast %297 : vector<1x1x32xf32> to vector<1x32xf32>
    %299 = vector.broadcast %298 : vector<1x32xf32> to vector<16x32xf32>
    %300 = arith.addf %296, %299 : vector<16x32xf32>
    %301 = arith.addf %282, %300 : vector<16x32xf32>
    %c0_121 = arith.constant 0 : index
    %c0_122 = arith.constant 0 : index
    %302 = vector.load %arg16[%c0_121, %c0_122] : memref<1x32xf32, #tpu.memory_space<vmem>>, vector<1x32xf32>
    %c0_123 = arith.constant 0 : index
    %c0_124 = arith.constant 0 : index
    %303 = vector.load %arg17[%c0_123, %c0_124] : memref<1x32xf32, #tpu.memory_space<vmem>>, vector<1x32xf32>
    %cst_125 = arith.constant dense<0.000000e+00> : vector<16xf32>
    %304 = vector.multi_reduction <add>, %301, %cst_125 [1] : vector<16x32xf32> to vector<16xf32>
    %305 = vector.shape_cast %304 : vector<16xf32> to vector<16x1xf32>
    %cst_126 = arith.constant 3.200000e+01 : f32
    %306 = vector.broadcast %cst_126 : f32 to vector<16x1xf32>
    %307 = arith.divf %305, %306 : vector<16x1xf32>
    %308 = vector.broadcast %307 : vector<16x1xf32> to vector<16x32xf32>
    %309 = arith.subf %301, %308 : vector<16x32xf32>
    %310 = arith.mulf %309, %309 : vector<16x32xf32>
    %cst_127 = arith.constant dense<0.000000e+00> : vector<16xf32>
    %311 = vector.multi_reduction <add>, %310, %cst_127 [1] : vector<16x32xf32> to vector<16xf32>
    %312 = vector.shape_cast %311 : vector<16xf32> to vector<16x1xf32>
    %cst_128 = arith.constant 3.200000e+01 : f32
    %313 = vector.broadcast %cst_128 : f32 to vector<16x1xf32>
    %314 = arith.divf %312, %313 : vector<16x1xf32>
    %315 = vector.broadcast %307 : vector<16x1xf32> to vector<16x32xf32>
    %316 = arith.subf %301, %315 : vector<16x32xf32>
    %cst_129 = arith.constant 9.99999974E-6 : f32
    %317 = vector.broadcast %cst_129 : f32 to vector<16x1xf32>
    %318 = arith.addf %314, %317 : vector<16x1xf32>
    %319 = math.rsqrt %318 : vector<16x1xf32>
    %320 = vector.broadcast %319 : vector<16x1xf32> to vector<16x32xf32>
    %321 = arith.mulf %316, %320 : vector<16x32xf32>
    %322 = vector.broadcast %302 : vector<1x32xf32> to vector<16x32xf32>
    %323 = arith.mulf %321, %322 : vector<16x32xf32>
    %324 = vector.broadcast %303 : vector<1x32xf32> to vector<16x32xf32>
    %325 = arith.addf %323, %324 : vector<16x32xf32>
    %326 = arith.truncf %325 : vector<16x32xf32> to vector<16x32xbf16>
    %c0_130 = arith.constant 0 : index
    %c0_131 = arith.constant 0 : index
    %327 = vector.load %arg18[%c0_130, %c0_131] : memref<32x128xbf16, #tpu.memory_space<vmem>>, vector<32x128xbf16>
    %cst_132 = arith.constant dense<0.000000e+00> : vector<16x128xf32>
    %328 = tpu.matmul %326, %327, %cst_132 {dimension_numbers = #tpu.dot_dimension_numbers<[1], [0], [0], [1], [0, 0, 1, 1], [], []>} : vector<16x32xbf16>, vector<32x128xbf16>, vector<16x128xf32> -> vector<16x128xf32>
    %c0_133 = arith.constant 0 : index
    %c0_134 = arith.constant 0 : index
    %329 = vector.load %arg19[%c0_133, %c0_134] : memref<16x128xf32, #tpu.memory_space<vmem>>, vector<16x128xf32>
    tpu.vector_store %arg19[%c0_133, %c0_134], %328 {strides = array<i32>} : memref<16x128xf32, #tpu.memory_space<vmem>>, vector<16x128xf32>,
    return
  }
}

</mosaic_0001>

<llo_original>
// kernel: transformer_forward.1
$region0: #{transformer_forward.1}
  #allocation0 [shape = 'u32[]', space=smem, size = 0x4, offset = 0x4, fixed_abs, tag = 'smem constant byte address 0x4 - core index']
  #allocation1 [shape = 'u32[72,128]{1,0:T(1,128)}', space=vmem, size = 0x9000, scoped, tag = 'internal scratch']
  %s0 = inlined_call_operand.vmem [shape: f32[16,32], index: 0, kind: input, shape index: {}]
  %s1 = inlined_call_operand.vmem [shape: f32[8,32], index: 1, kind: input, shape index: {}]
  %s2 = inlined_call_operand.vmem [shape: f32[8,32], index: 2, kind: input, shape index: {}]
  %s3 = inlined_call_operand.vmem [shape: bf16[32,32], index: 3, kind: input, shape index: {}]
  %s4 = inlined_call_operand.vmem [shape: f32[2,1,32], index: 4, kind: input, shape index: {}]
  %s5 = inlined_call_operand.vmem [shape: f32[2,1,32], index: 5, kind: input, shape index: {}]
  %s6 = inlined_call_operand.vmem [shape: bf16[2,32,96], index: 6, kind: input, shape index: {}]
  %s7 = inlined_call_operand.vmem [shape: f32[2,1,96], index: 7, kind: input, shape index: {}]
  %s8 = inlined_call_operand.vmem [shape: bf16[2,32,32], index: 8, kind: input, shape index: {}]
  %s9 = inlined_call_operand.vmem [shape: f32[2,1,32], index: 9, kind: input, shape index: {}]
  %s10 = inlined_call_operand.vmem [shape: f32[2,1,32], index: 10, kind: input, shape index: {}]
  %s11 = inlined_call_operand.vmem [shape: f32[2,1,32], index: 11, kind: input, shape index: {}]
  %s12 = inlined_call_operand.vmem [shape: bf16[2,32,64], index: 12, kind: input, shape index: {}]
  %s13 = inlined_call_operand.vmem [shape: f32[2,1,64], index: 13, kind: input, shape index: {}]
  %s14 = inlined_call_operand.vmem [shape: bf16[2,64,32], index: 14, kind: input, shape index: {}]
  %s15 = inlined_call_operand.vmem [shape: f32[2,1,32], index: 15, kind: input, shape index: {}]
  %s16 = inlined_call_operand.vmem [shape: f32[1,32], index: 16, kind: input, shape index: {}]
  %s17 = inlined_call_operand.vmem [shape: f32[1,32], index: 17, kind: input, shape index: {}]
  %s18 = inlined_call_operand.vmem [shape: bf16[32,128], index: 18, kind: input, shape index: {}]
  %s19 = inlined_call_operand.vmem [shape: f32[16,128], index: 19, kind: output, shape index: {}]
  %s20 = sld [smem:[#allocation0]]
  $region86: #{transformer_forward.1} parent=0
    _
  %s22 = ssub.s32 1, %s20
  %s23 = scalar_select 0, %s22, %s20
  // Predicated region
  $region2: #{transformer_forward.1} parent=0 // pred_check
    _
  $region3: #{transformer_forward.1} parent=0 // pred_check_branch
    %25 = sbr.rel (0) target = $region5
  $region4: #{transformer_forward.1} parent=0 // pred_region
    _
  $region5: #{transformer_forward.1} parent=0 // pred_fallthru
    _
  // Predicated region
  $region6: #{transformer_forward.1} parent=0 // pred_check
    _
  $region7: #{transformer_forward.1} parent=0 // pred_check_branch
    %27 = sbr.rel (0) target = $region9
  $region8: #{transformer_forward.1} parent=0 // pred_region
    _
  $region9: #{transformer_forward.1} parent=0 // pred_fallthru
    _
  // Predicated region
  $region10: #{transformer_forward.1} parent=0 // pred_check
    _
  $region11: #{transformer_forward.1} parent=0 // pred_check_branch
    %29 = sbr.rel (0) target = $region13
  $region12: #{transformer_forward.1} parent=0 // pred_region
    _
  $region13: #{transformer_forward.1} parent=0 // pred_fallthru
    _
  // Predicated region
  $region14: #{transformer_forward.1} parent=0 // pred_check
    _
  $region15: #{transformer_forward.1} parent=0 // pred_check_branch
    %31 = sbr.rel (0) target = $region17
  $region16: #{transformer_forward.1} parent=0 // pred_region
    _
  $region17: #{transformer_forward.1} parent=0 // pred_fallthru
    _
  // Predicated region
  $region18: #{transformer_forward.1} parent=0 // pred_check
    _
  $region19: #{transformer_forward.1} parent=0 // pred_check_branch
    %33 = sbr.rel (0) target = $region21
  $region20: #{transformer_forward.1} parent=0 // pred_region
    _
  $region21: #{transformer_forward.1} parent=0 // pred_fallthru
    _
  // Predicated region
  $region22: #{transformer_forward.1} parent=0 // pred_check
    _
  $region23: #{transformer_forward.1} parent=0 // pred_check_branch
    %35 = sbr.rel (0) target = $region25
  $region24: #{transformer_forward.1} parent=0 // pred_region
    _
  $region25: #{transformer_forward.1} parent=0 // pred_fallthru
    _
  // Predicated region
  $region26: #{transformer_forward.1} parent=0 // pred_check
    _
  $region27: #{transformer_forward.1} parent=0 // pred_check_branch
    %37 = sbr.rel (0) target = $region29
  $region28: #{transformer_forward.1} parent=0 // pred_region
    _
  $region29: #{transformer_forward.1} parent=0 // pred_fallthru
    _
  // Predicated region
  $region30: #{transformer_forward.1} parent=0 // pred_check
    _
  $region31: #{transformer_forward.1} parent=0 // pred_check_branch
    %39 = sbr.rel (0) target = $region33
  $region32: #{transformer_forward.1} parent=0 // pred_region
    _
  $region33: #{transformer_forward.1} parent=0 // pred_fallthru
    _
  // Predicated region
  $region34: #{transformer_forward.1} parent=0 // pred_check
    _
  $region35: #{transformer_forward.1} parent=0 // pred_check_branch
    %41 = sbr.rel (0) target = $region37
  $region36: #{transformer_forward.1} parent=0 // pred_region
    _
  $region37: #{transformer_forward.1} parent=0 // pred_fallthru
    _
  // Predicated region
  $region38: #{transformer_forward.1} parent=0 // pred_check
    _
  $region39: #{transformer_forward.1} parent=0 // pred_check_branch
    %43 = sbr.rel (0) target = $region41
  $region40: #{transformer_forward.1} parent=0 // pred_region
    _
  $region41: #{transformer_forward.1} parent=0 // pred_fallthru
    _
  // Predicated region
  $region42: #{transformer_forward.1} parent=0 // pred_check
    _
  $region43: #{transformer_forward.1} parent=0 // pred_check_branch
    %45 = sbr.rel (0) target = $region45
  $region44: #{transformer_forward.1} parent=0 // pred_region
    _
  $region45: #{transformer_forward.1} parent=0 // pred_fallthru
    _
  // Predicated region
  $region46: #{transformer_forward.1} parent=0 // pred_check
    _
  $region47: #{transformer_forward.1} parent=0 // pred_check_branch
    %47 = sbr.rel (0) target = $region49
  $region48: #{transformer_forward.1} parent=0 // pred_region
    _
  $region49: #{transformer_forward.1} parent=0 // pred_fallthru
    _
  // Predicated region
  $region50: #{transformer_forward.1} parent=0 // pred_check
    _
  $region51: #{transformer_forward.1} parent=0 // pred_check_branch
    %49 = sbr.rel (0) target = $region53
  $region52: #{transformer_forward.1} parent=0 // pred_region
    _
  $region53: #{transformer_forward.1} parent=0 // pred_fallthru
    _
  // Predicated region
  $region54: #{transformer_forward.1} parent=0 // pred_check
    _
  $region55: #{transformer_forward.1} parent=0 // pred_check_branch
    %51 = sbr.rel (0) target = $region57
  $region56: #{transformer_forward.1} parent=0 // pred_region
    _
  $region57: #{transformer_forward.1} parent=0 // pred_fallthru
    _
  // Predicated region
  $region58: #{transformer_forward.1} parent=0 // pred_check
    _
  $region59: #{transformer_forward.1} parent=0 // pred_check_branch
    %53 = sbr.rel (0) target = $region61
  $region60: #{transformer_forward.1} parent=0 // pred_region
    _
  $region61: #{transformer_forward.1} parent=0 // pred_fallthru
    _
  // Predicated region
  $region62: #{transformer_forward.1} parent=0 // pred_check
    _
  $region63: #{transformer_forward.1} parent=0 // pred_check_branch
    %55 = sbr.rel (0) target = $region65
  $region64: #{transformer_forward.1} parent=0 // pred_region
    _
  $region65: #{transformer_forward.1} parent=0 // pred_fallthru
    _
  // Predicated region
  $region66: #{transformer_forward.1} parent=0 // pred_check
    _
  $region67: #{transformer_forward.1} parent=0 // pred_check_branch
    %57 = sbr.rel (0) target = $region69
  $region68: #{transformer_forward.1} parent=0 // pred_region
    _
  $region69: #{transformer_forward.1} parent=0 // pred_fallthru
    _
  // Predicated region
  $region70: #{transformer_forward.1} parent=0 // pred_check
    _
  $region71: #{transformer_forward.1} parent=0 // pred_check_branch
    %59 = sbr.rel (0) target = $region73
  $region72: #{transformer_forward.1} parent=0 // pred_region
    _
  $region73: #{transformer_forward.1} parent=0 // pred_fallthru
    _
  // Predicated region
  $region74: #{transformer_forward.1} parent=0 // pred_check
    _
  $region75: #{transformer_forward.1} parent=0 // pred_check_branch
    %61 = sbr.rel (0) target = $region77
  $region76: #{transformer_forward.1} parent=0 // pred_region
    _
  $region77: #{transformer_forward.1} parent=0 // pred_fallthru
    _
  %v63 = vld [vmem:[%s0] sm:$0xff]
  %v64 = vld [vmem:[%s0 + $0x8] sm:$0xff]
  %v65 = vlaneseq
  %v66 = vshrl.u32 %v65, 7
  %v67 = vlaneseq
  %v68 = vand.u32 %v67, 127
  %vm69 = vcmp.gt.s32.totalorder %v68, %v66
  %v70 = vsel %vm69, 1, 0
  %v71 = vcvt.s32.f32 %v70
  %v72 = vld [vmem:[%s1] sm:$0xff]
  %v73 = vld [vmem:[%s2] sm:$0xff]
  %v74 = vld [vmem:[%s3] sm:$0xf]
  %v75 = vld [vmem:[%s3 + $0x4] sm:$0xf]
  %v76 = vld [vmem:[%s3 + $0x8] sm:$0xf]
  %v77 = vld [vmem:[%s3 + $0xc] sm:$0xf]
  %v78 = vld [vmem:[%s4] sm:$0x1]
  %v79 = vld [vmem:[%s5] sm:$0x1]
  %vm80 = vcmask 261120
  %v81 = vsel %vm80, %v63, 0.0
  %82 = vadd.xlane.f32.xlu0 %v81
  %v83 = vpop.xlane.xlu0 %82
  %v84 = vsel %vm80, %v64, 0.0
  %85 = vadd.xlane.f32.xlu0 %v84
  %v86 = vpop.xlane.xlu0 %85
  %v87 = vrcp.pop 32.0
  %v88 = vmul.f32 32.0, %v87
  %v89 = vsub.f32 1.0, %v88
  %v90 = vmul.f32 %v87, %v89
  %v91 = vadd.f32 %v87, %v90
  %vm92 = vweird.f32 %v87
  %v93 = vsel %vm92, %v87, %v91
  %v94 = vmul.f32 %v83, %v93
  %v95 = vmul.f32 %v86, %v93
  %v96 = vsub.f32 %v63, %v94
  %v97 = vsub.f32 %v64, %v95
  %v98 = vmul.f32 %v96, %v96
  %v99 = vmul.f32 %v97, %v97
  %v100 = vsel %vm80, %v98, 0.0
  %101 = vadd.xlane.f32.xlu0 %v100
  %v102 = vpop.xlane.xlu0 %101
  %v103 = vsel %vm80, %v99, 0.0
  %104 = vadd.xlane.f32.xlu0 %v103
  %v105 = vpop.xlane.xlu0 %104
  %v106 = vmul.f32 %v102, %v93
  %v107 = vmul.f32 %v105, %v93
  %v108 = vadd.f32 %v106, 1e-05
  %v109 = vadd.f32 %v107, 1e-05
  %v110 = vrsqrt.pop %v108
  %v111 = vmul.f32 %v110, %v108
  %v112 = vmul.f32 %v111, %v110
  %v113 = vmul.f32 0.5, %v112
  %v114 = vsub.f32 1.5, %v113
  %v115 = vmul.f32 %v110, %v114
  %vm116 = vweird.f32 %v108
  %vm117 = vweird.f32 %v110
  %vm118 = vmor %vm116, %vm117
  %v119 = vsel %vm118, %v110, %v115
  %v120 = vrsqrt.pop %v109
  %v121 = vmul.f32 %v120, %v109
  %v122 = vmul.f32 %v121, %v120
  %v123 = vmul.f32 0.5, %v122
  %v124 = vsub.f32 1.5, %v123
  %v125 = vmul.f32 %v120, %v124
  %vm126 = vweird.f32 %v109
  %vm127 = vweird.f32 %v120
  %vm128 = vmor %vm126, %vm127
  %v129 = vsel %vm128, %v120, %v125
  %v130 = vmul.f32 %v96, %v119
  %v131 = vmul.f32 %v97, %v129
  %v133 = vperm.slane %v78, 0
  %v135 = vmul.f32 %v130, %v133
  %v136 = vmul.f32 %v131, %v133
  %v138 = vperm.slane %v79, 0
  %v140 = vadd.f32 %v135, %v138
  %v141 = vadd.f32 %v136, %v138
  %v142 = vpack.c.bf16 %v141, %v140
  %v143 = vld [vmem:[%s6] sm:$0xf]
  %v144 = vld [vmem:[%s6 + $0x4] sm:$0xf]
  %v145 = vld [vmem:[%s6 + $0x8] sm:$0xf]
  %v146 = vld [vmem:[%s6 + $0xc] sm:$0xf]
  %v147 = vld [vmem:[%s7] sm:$0x1]
  %v149 = vperm.slane %v147, 0
  %v155 = vunpack.c.l.b16 %v143
  %v156 = vunpack.c.l.b16 %v144
  %v157 = vunpack.c.l.b16 %v145
  %v158 = vunpack.c.l.b16 %v146
  %v159 = vpack.c.b16 %v156, %v155
  %v160 = vpack.c.b16 %v158, %v157
  %v164 = vsel %vm80, %v142, 0
  %166 = vmatpush.bf16.msra.mxu0 0
  %167 = vmatpush.bf16.msra.mxu0 0
  %168 = vmatpush.bf16.msra.mxu0 0
  %169 = vmatpush.bf16.msra.mxu0 0
  %170 = vmatpush.bf16.msra.mxu0 0
  %171 = vmatpush.bf16.msra.mxu0 0
  %172 = vmatpush.bf16.msra.mxu0 %v160
  %173 = vmatpush.bf16.msra.mxu0 %v159
  %174 = vmatmul.bf16.gmra.mxu0 %v164
  %v175 = vpop.f32.mrf.mxu0
  %v176 = vadd.f32 %v149, %v175
  %v177 = vpop.f32.mrf.mxu0
  %v178 = vadd.f32 %v149, %v177
  %179 = vdwg.mxu0
  %v180 = vmul.f32 %v176, %v72
  %v181 = vmul.f32 %v178, %v72
  %v182 = vpack.c.bf16 %v178, %v176
  %v187 = vunpack.c.l.b16 %v74
  %v188 = vunpack.c.l.b16 %v75
  %v189 = vunpack.c.l.b16 %v76
  %v190 = vunpack.c.l.b16 %v77
  %v191 = vpack.c.b16 %v188, %v187
  %v192 = vpack.c.b16 %v190, %v189
  %v196 = vsel %vm80, %v182, 0
  %198 = vmatpush.bf16.msra.mxu0 0
  %199 = vmatpush.bf16.msra.mxu0 0
  %200 = vmatpush.bf16.msra.mxu0 0
  %201 = vmatpush.bf16.msra.mxu0 0
  %202 = vmatpush.bf16.msra.mxu0 0
  %203 = vmatpush.bf16.msra.mxu0 0
  %204 = vmatpush.bf16.msra.mxu0 %v192
  %205 = vmatpush.bf16.msra.mxu0 %v191
  %206 = vmatmul.bf16.gmra.mxu0 %v196
  %v207 = vpop.f32.mrf.mxu0
  %v208 = vadd.f32 0.0, %v207
  %v209 = vpop.f32.mrf.mxu0
  %v210 = vadd.f32 0.0, %v209
  %211 = vdwg.mxu0
  %v212 = vmul.f32 %v208, %v73
  %v213 = vmul.f32 %v210, %v73
  %v214 = vadd.f32 %v180, %v212
  %v215 = vadd.f32 %v181, %v213
  %v216 = vmul.f32 %v214, 0.25
  %v217 = vmul.f32 %v215, 0.25
  %219 = vrot.lane.b32.xlu0 %v72, 32
  %v220 = vpop.permute.xlu0 %219
  %v222 = vmul.f32 %v176, %v220
  %v223 = vmul.f32 %v178, %v220
  %225 = vrot.lane.b32.xlu0 %v182, 96
  %v226 = vpop.permute.xlu0 %225
  %v228 = vsel %vm80, %v226, 0
  %230 = vmatpush.bf16.msra.mxu0 0
  %231 = vmatpush.bf16.msra.mxu0 0
  %232 = vmatpush.bf16.msra.mxu0 0
  %233 = vmatpush.bf16.msra.mxu0 0
  %234 = vmatpush.bf16.msra.mxu0 0
  %235 = vmatpush.bf16.msra.mxu0 0
  %236 = vmatpush.bf16.msra.mxu0 %v192
  %237 = vmatpush.bf16.msra.mxu0 %v191
  %238 = vmatmul.bf16.gmra.mxu0 %v228
  %v239 = vpop.f32.mrf.mxu0
  %v240 = vadd.f32 0.0, %v239
  %v241 = vpop.f32.mrf.mxu0
  %v242 = vadd.f32 0.0, %v241
  %243 = vdwg.mxu0
  %v244 = vmul.f32 %v240, %v73
  %v245 = vmul.f32 %v242, %v73
  %248 = vrot.lane.b32.xlu0 %v244, 32
  %v249 = vpop.permute.xlu0 %248
  %250 = vrot.lane.b32.xlu0 %v245, 32
  %v251 = vpop.permute.xlu0 %250
  %v254 = vadd.f32 %v222, %v249
  %v255 = vadd.f32 %v223, %v251
  %258 = vrot.lane.b32.xlu0 %v216, 112
  %v259 = vpop.permute.xlu0 %258
  %260 = vrot.lane.b32.xlu0 %v217, 112
  %v261 = vpop.permute.xlu0 %260
  %266 = vrot.lane.b32.xlu0 %v254, 112
  %v267 = vpop.permute.xlu0 %266
  %268 = vrot.lane.b32.xlu0 %v255, 112
  %v269 = vpop.permute.xlu0 %268
  %274 = vrot.lane.b32.xlu0 %v176, 112
  %v275 = vpop.permute.xlu0 %274
  %276 = vrot.lane.b32.xlu0 %v178, 112
  %v277 = vpop.permute.xlu0 %276
  %v280 = vpack.c.bf16 %v216, %v216
  %v281 = vpack.c.bf16 %v217, %v217
  %v282 = vpack.c.bf16 %v259, %v259
  %v283 = vpack.c.bf16 %v261, %v261
  %v284 = vpack.c.bf16 %v254, %v254
  %v285 = vpack.c.bf16 %v255, %v255
  %v286 = vpack.c.bf16 %v267, %v267
  %v287 = vpack.c.bf16 %v269, %v269
  %v288 = vpack.c.bf16 %v176, %v176
  %v289 = vpack.c.bf16 %v178, %v178
  %v290 = vpack.c.bf16 %v275, %v275
  %v291 = vpack.c.bf16 %v277, %v277
  %v293 = vunpack.c.l.b16 %v284
  %v294 = vpack.c.b16 %v293, %v293
  %295 = vrot.lane.b32.xlu0 %v294, 96
  %v296 = vpop.permute.xlu0 %295
  %vm297 = vcmask 130048
  %v299 = vsel %vm297, %v280, 0
  %v302 = vsel %vm297, %v296, 0
  %304 = vmatpush.bf16.xpose.msra.mxu0 0
  %305 = vmatpush.bf16.xpose.msra.mxu0 0
  %306 = vmatpush.bf16.xpose.msra.mxu0 0
  %307 = vmatpush.bf16.xpose.msra.mxu0 0
  %308 = vmatpush.bf16.xpose.msra.mxu0 0
  %309 = vmatpush.bf16.xpose.msra.mxu0 0
  %310 = vmatpush.bf16.xpose.msra.mxu0 0
  %311 = vmatpush.bf16.xpose.msra.mxu0 %v302
  %312 = vmatmul.bf16.gmra.mxu0 %v299
  %v313 = vpop.f32.mrf.mxu0
  %v314 = vadd.f32 %v71, %v313
  %v315 = vpop.f32.mrf.mxu0
  %316 = vdwg.mxu0
  %v318 = vunpack.c.l.b16 %v285
  %v319 = vpack.c.b16 %v318, %v318
  %320 = vrot.lane.b32.xlu0 %v319, 96
  %v321 = vpop.permute.xlu0 %320
  %v323 = vsel %vm297, %v281, 0
  %v326 = vsel %vm297, %v321, 0
  %328 = vmatpush.bf16.xpose.msra.mxu0 0
  %329 = vmatpush.bf16.xpose.msra.mxu0 0
  %330 = vmatpush.bf16.xpose.msra.mxu0 0
  %331 = vmatpush.bf16.xpose.msra.mxu0 0
  %332 = vmatpush.bf16.xpose.msra.mxu0 0
  %333 = vmatpush.bf16.xpose.msra.mxu0 0
  %334 = vmatpush.bf16.xpose.msra.mxu0 0
  %335 = vmatpush.bf16.xpose.msra.mxu0 %v326
  %336 = vmatmul.bf16.gmra.mxu0 %v323
  %v337 = vpop.f32.mrf.mxu0
  %v338 = vadd.f32 %v71, %v337
  %v339 = vpop.f32.mrf.mxu0
  %340 = vdwg.mxu0
  %v342 = vunpack.c.l.b16 %v286
  %v343 = vpack.c.b16 %v342, %v342
  %344 = vrot.lane.b32.xlu0 %v343, 96
  %v345 = vpop.permute.xlu0 %344
  %v347 = vsel %vm297, %v282, 0
  %v350 = vsel %vm297, %v345, 0
  %352 = vmatpush.bf16.xpose.msra.mxu0 0
  %353 = vmatpush.bf16.xpose.msra.mxu0 0
  %354 = vmatpush.bf16.xpose.msra.mxu0 0
  %355 = vmatpush.bf16.xpose.msra.mxu0 0
  %356 = vmatpush.bf16.xpose.msra.mxu0 0
  %357 = vmatpush.bf16.xpose.msra.mxu0 0
  %358 = vmatpush.bf16.xpose.msra.mxu0 0
  %359 = vmatpush.bf16.xpose.msra.mxu0 %v350
  %360 = vmatmul.bf16.gmra.mxu0 %v347
  %v361 = vpop.f32.mrf.mxu0
  %v362 = vadd.f32 %v71, %v361
  %v363 = vpop.f32.mrf.mxu0
  %364 = vdwg.mxu0
  %v366 = vunpack.c.l.b16 %v287
  %v367 = vpack.c.b16 %v366, %v366
  %368 = vrot.lane.b32.xlu0 %v367, 96
  %v369 = vpop.permute.xlu0 %368
  %v371 = vsel %vm297, %v283, 0
  %v374 = vsel %vm297, %v369, 0
  %376 = vmatpush.bf16.xpose.msra.mxu0 0
  %377 = vmatpush.bf16.xpose.msra.mxu0 0
  %378 = vmatpush.bf16.xpose.msra.mxu0 0
  %379 = vmatpush.bf16.xpose.msra.mxu0 0
  %380 = vmatpush.bf16.xpose.msra.mxu0 0
  %381 = vmatpush.bf16.xpose.msra.mxu0 0
  %382 = vmatpush.bf16.xpose.msra.mxu0 0
  %383 = vmatpush.bf16.xpose.msra.mxu0 %v374
  %384 = vmatmul.bf16.gmra.mxu0 %v371
  %v385 = vpop.f32.mrf.mxu0
  %v386 = vadd.f32 %v71, %v385
  %v387 = vpop.f32.mrf.mxu0
  %388 = vdwg.mxu0
  %vm389 = vcmask 64512
  %v390 = vsel %vm389, %v314, -inf
  %391 = vmax.xlane.f32.xlu0 %v390
  %v392 = vpop.xlane.xlu0 %391
  %v393 = vsel %vm389, %v338, -inf
  %394 = vmax.xlane.f32.xlu0 %v393
  %v395 = vpop.xlane.xlu0 %394
  %v396 = vsel %vm389, %v362, -inf
  %397 = vmax.xlane.f32.xlu0 %v396
  %v398 = vpop.xlane.xlu0 %397
  %v399 = vsel %vm389, %v386, -inf
  %400 = vmax.xlane.f32.xlu0 %v399
  %v401 = vpop.xlane.xlu0 %400
  %v402 = vsub.f32 %v314, %v392
  %v403 = vsub.f32 %v338, %v395
  %v404 = vsub.f32 %v362, %v398
  %v405 = vsub.f32 %v386, %v401
  %v406 = vmul.f32 %v402, 1.442695
  %v407 = vpow.pop %v406
  %v408 = vmul.f32 %v403, 1.442695
  %v409 = vpow.pop %v408
  %v410 = vmul.f32 %v404, 1.442695
  %v411 = vpow.pop %v410
  %v412 = vmul.f32 %v405, 1.442695
  %v413 = vpow.pop %v412
  %v414 = vsel %vm389, %v407, 0.0
  %415 = vadd.xlane.f32.xlu0 %v414
  %v416 = vpop.xlane.xlu0 %415
  %v417 = vsel %vm389, %v409, 0.0
  %418 = vadd.xlane.f32.xlu0 %v417
  %v419 = vpop.xlane.xlu0 %418
  %v420 = vsel %vm389, %v411, 0.0
  %421 = vadd.xlane.f32.xlu0 %v420
  %v422 = vpop.xlane.xlu0 %421
  %v423 = vsel %vm389, %v413, 0.0
  %424 = vadd.xlane.f32.xlu0 %v423
  %v425 = vpop.xlane.xlu0 %424
  %v426 = vrcp.pop %v416
  %v427 = vrcp.pop %v419
  %v428 = vrcp.pop %v422
  %v429 = vrcp.pop %v425
  %v430 = vmul.f32 %v407, %v426
  %v431 = vmul.f32 %v409, %v427
  %v432 = vmul.f32 %v411, %v428
  %v433 = vmul.f32 %v413, %v429
  %v434 = vpack.c.bf16 %v430, %v430
  %v435 = vpack.c.bf16 %v431, %v431
  %v436 = vpack.c.bf16 %v432, %v432
  %v437 = vpack.c.bf16 %v433, %v433
  %v439 = vunpack.c.l.b16 %v288
  %v440 = vpack.c.b16 %v439, %v439
  %441 = vrot.lane.b32.xlu0 %v440, 64
  %v442 = vpop.permute.xlu0 %441
  %v444 = vsel %vm389, %v434, 0
  %vm446 = vcmask 1043456
  %v448 = vsel %vm446, %v442, 0
  %450 = vmatpush.bf16.msra.mxu0 0
  %451 = vmatpush.bf16.msra.mxu0 0
  %452 = vmatpush.bf16.msra.mxu0 0
  %453 = vmatpush.bf16.msra.mxu0 0
  %454 = vmatpush.bf16.msra.mxu0 0
  %455 = vmatpush.bf16.msra.mxu0 0
  %456 = vmatpush.bf16.msra.mxu0 0
  %457 = vmatpush.bf16.msra.mxu0 %v448
  %458 = vmatmul.bf16.gmra.mxu0 %v444
  %v459 = vpop.f32.mrf.mxu0
  %v460 = vadd.f32 0.0, %v459
  %v461 = vpop.f32.mrf.mxu0
  %462 = vdwg.mxu0
  %v464 = vunpack.c.l.b16 %v289
  %v465 = vpack.c.b16 %v464, %v464
  %466 = vrot.lane.b32.xlu0 %v465, 64
  %v467 = vpop.permute.xlu0 %466
  %v469 = vsel %vm389, %v435, 0
  %v472 = vsel %vm446, %v467, 0
  %474 = vmatpush.bf16.msra.mxu0 0
  %475 = vmatpush.bf16.msra.mxu0 0
  %476 = vmatpush.bf16.msra.mxu0 0
  %477 = vmatpush.bf16.msra.mxu0 0
  %478 = vmatpush.bf16.msra.mxu0 0
  %479 = vmatpush.bf16.msra.mxu0 0
  %480 = vmatpush.bf16.msra.mxu0 0
  %481 = vmatpush.bf16.msra.mxu0 %v472
  %482 = vmatmul.bf16.gmra.mxu0 %v469
  %v483 = vpop.f32.mrf.mxu0
  %v484 = vadd.f32 0.0, %v483
  %v485 = vpop.f32.mrf.mxu0
  %486 = vdwg.mxu0
  %v488 = vunpack.c.l.b16 %v290
  %v489 = vpack.c.b16 %v488, %v488
  %490 = vrot.lane.b32.xlu0 %v489, 64
  %v491 = vpop.permute.xlu0 %490
  %v493 = vsel %vm389, %v436, 0
  %v496 = vsel %vm446, %v491, 0
  %498 = vmatpush.bf16.msra.mxu0 0
  %499 = vmatpush.bf16.msra.mxu0 0
  %500 = vmatpush.bf16.msra.mxu0 0
  %501 = vmatpush.bf16.msra.mxu0 0
  %502 = vmatpush.bf16.msra.mxu0 0
  %503 = vmatpush.bf16.msra.mxu0 0
  %504 = vmatpush.bf16.msra.mxu0 0
  %505 = vmatpush.bf16.msra.mxu0 %v496
  %506 = vmatmul.bf16.gmra.mxu0 %v493
  %v507 = vpop.f32.mrf.mxu0
  %v508 = vadd.f32 0.0, %v507
  %v509 = vpop.f32.mrf.mxu0
  %510 = vdwg.mxu0
  %v512 = vunpack.c.l.b16 %v291
  %v513 = vpack.c.b16 %v512, %v512
  %514 = vrot.lane.b32.xlu0 %v513, 64
  %v515 = vpop.permute.xlu0 %514
  %v517 = vsel %vm389, %v437, 0
  %v520 = vsel %vm446, %v515, 0
  %522 = vmatpush.bf16.msra.mxu0 0
  %523 = vmatpush.bf16.msra.mxu0 0
  %524 = vmatpush.bf16.msra.mxu0 0
  %525 = vmatpush.bf16.msra.mxu0 0
  %526 = vmatpush.bf16.msra.mxu0 0
  %527 = vmatpush.bf16.msra.mxu0 0
  %528 = vmatpush.bf16.msra.mxu0 0
  %529 = vmatpush.bf16.msra.mxu0 %v520
  %530 = vmatmul.bf16.gmra.mxu0 %v517
  %v531 = vpop.f32.mrf.mxu0
  %v532 = vadd.f32 0.0, %v531
  %v533 = vpop.f32.mrf.mxu0
  %534 = vdwg.mxu0
  %537 = vrot.lane.b32.xlu0 %v508, 16
  %v538 = vpop.permute.xlu0 %537
  %539 = vrot.lane.b32.xlu0 %v532, 16
  %v540 = vpop.permute.xlu0 %539
  %v543 = vsel %vm297, %v460, %v538
  %v544 = vsel %vm297, %v484, %v540
  %v545 = vpack.c.bf16 %v544, %v543
  %v546 = vld [vmem:[%s8] sm:$0xf]
  %v547 = vld [vmem:[%s8 + $0x4] sm:$0xf]
  %v548 = vld [vmem:[%s8 + $0x8] sm:$0xf]
  %v549 = vld [vmem:[%s8 + $0xc] sm:$0xf]
  %v550 = vld [vmem:[%s9] sm:$0x1]
  %v552 = vperm.slane %v550, 0
  %v558 = vunpack.c.l.b16 %v546
  %v559 = vunpack.c.l.b16 %v547
  %v560 = vunpack.c.l.b16 %v548
  %v561 = vunpack.c.l.b16 %v549
  %v562 = vpack.c.b16 %v559, %v558
  %v563 = vpack.c.b16 %v561, %v560
  %v567 = vsel %vm80, %v545, 0
  %569 = vmatpush.bf16.msra.mxu0 0
  %570 = vmatpush.bf16.msra.mxu0 0
  %571 = vmatpush.bf16.msra.mxu0 0
  %572 = vmatpush.bf16.msra.mxu0 0
  %573 = vmatpush.bf16.msra.mxu0 0
  %574 = vmatpush.bf16.msra.mxu0 0
  %575 = vmatpush.bf16.msra.mxu0 %v563
  %576 = vmatpush.bf16.msra.mxu0 %v562
  %577 = vmatmul.bf16.gmra.mxu0 %v567
  %v578 = vpop.f32.mrf.mxu0
  %v579 = vadd.f32 %v552, %v578
  %v580 = vpop.f32.mrf.mxu0
  %v581 = vadd.f32 %v552, %v580
  %582 = vdwg.mxu0
  %v583 = vadd.f32 %v140, %v579
  %v584 = vadd.f32 %v141, %v581
  %v585 = vld [vmem:[%s10] sm:$0x1]
  %v586 = vld [vmem:[%s11] sm:$0x1]
  %v587 = vsel %vm80, %v583, 0.0
  %588 = vadd.xlane.f32.xlu0 %v587
  %v589 = vpop.xlane.xlu0 %588
  %v590 = vsel %vm80, %v584, 0.0
  %591 = vadd.xlane.f32.xlu0 %v590
  %v592 = vpop.xlane.xlu0 %591
  %v593 = vmul.f32 %v589, %v93
  %v594 = vmul.f32 %v592, %v93
  %v595 = vsub.f32 %v583, %v593
  %v596 = vsub.f32 %v584, %v594
  %v597 = vmul.f32 %v595, %v595
  %v598 = vmul.f32 %v596, %v596
  %v599 = vsel %vm80, %v597, 0.0
  %600 = vadd.xlane.f32.xlu0 %v599
  %v601 = vpop.xlane.xlu0 %600
  %v602 = vsel %vm80, %v598, 0.0
  %603 = vadd.xlane.f32.xlu0 %v602
  %v604 = vpop.xlane.xlu0 %603
  %v605 = vmul.f32 %v601, %v93
  %v606 = vmul.f32 %v604, %v93
  %v607 = vadd.f32 %v605, 1e-05
  %v608 = vadd.f32 %v606, 1e-05
  %v609 = vrsqrt.pop %v607
  %v610 = vmul.f32 %v609, %v607
  %v611 = vmul.f32 %v610, %v609
  %v612 = vmul.f32 0.5, %v611
  %v613 = vsub.f32 1.5, %v612
  %v614 = vmul.f32 %v609, %v613
  %vm615 = vweird.f32 %v607
  %vm616 = vweird.f32 %v609
  %vm617 = vmor %vm615, %vm616
  %v618 = vsel %vm617, %v609, %v614
  %v619 = vrsqrt.pop %v608
  %v620 = vmul.f32 %v619, %v608
  %v621 = vmul.f32 %v620, %v619
  %v622 = vmul.f32 0.5, %v621
  %v623 = vsub.f32 1.5, %v622
  %v624 = vmul.f32 %v619, %v623
  %vm625 = vweird.f32 %v608
  %vm626 = vweird.f32 %v619
  %vm627 = vmor %vm625, %vm626
  %v628 = vsel %vm627, %v619, %v624
  %v629 = vmul.f32 %v595, %v618
  %v630 = vmul.f32 %v596, %v628
  %v632 = vperm.slane %v585, 0
  %v634 = vmul.f32 %v629, %v632
  %v635 = vmul.f32 %v630, %v632
  %v637 = vperm.slane %v586, 0
  %v639 = vadd.f32 %v634, %v637
  %v640 = vadd.f32 %v635, %v637
  %v641 = vpack.c.bf16 %v640, %v639
  %v642 = vld [vmem:[%s12] sm:$0xf]
  %v643 = vld [vmem:[%s12 + $0x4] sm:$0xf]
  %v644 = vld [vmem:[%s12 + $0x8] sm:$0xf]
  %v645 = vld [vmem:[%s12 + $0xc] sm:$0xf]
  %v646 = vld [vmem:[%s13] sm:$0x1]
  %v648 = vperm.slane %v646, 0
  %v654 = vunpack.c.l.b16 %v642
  %v655 = vunpack.c.l.b16 %v643
  %v656 = vunpack.c.l.b16 %v644
  %v657 = vunpack.c.l.b16 %v645
  %v658 = vpack.c.b16 %v655, %v654
  %v659 = vpack.c.b16 %v657, %v656
  %v663 = vsel %vm80, %v641, 0
  %665 = vmatpush.bf16.msra.mxu0 0
  %666 = vmatpush.bf16.msra.mxu0 0
  %667 = vmatpush.bf16.msra.mxu0 0
  %668 = vmatpush.bf16.msra.mxu0 0
  %669 = vmatpush.bf16.msra.mxu0 0
  %670 = vmatpush.bf16.msra.mxu0 0
  %671 = vmatpush.bf16.msra.mxu0 %v659
  %672 = vmatpush.bf16.msra.mxu0 %v658
  %673 = vmatmul.bf16.gmra.mxu0 %v663
  %v674 = vpop.f32.mrf.mxu0
  %v675 = vadd.f32 %v648, %v674
  %v676 = vpop.f32.mrf.mxu0
  %v677 = vadd.f32 %v648, %v676
  %678 = vdwg.mxu0
  %v679 = vmax.f32 %v675, 0.0
  %v680 = vmax.f32 %v677, 0.0
  %v681 = vpack.c.bf16 %v680, %v679
  %v682 = vld [vmem:[%s14] sm:$0xf]
  %v683 = vld [vmem:[%s14 + $0x4] sm:$0xf]
  %v684 = vld [vmem:[%s14 + $0x8] sm:$0xf]
  %v685 = vld [vmem:[%s14 + $0xc] sm:$0xf]
  %v686 = vld [vmem:[%s14 + $0x10] sm:$0xf]
  %v687 = vld [vmem:[%s14 + $0x14] sm:$0xf]
  %v688 = vld [vmem:[%s14 + $0x18] sm:$0xf]
  %v689 = vld [vmem:[%s14 + $0x1c] sm:$0xf]
  %v690 = vld [vmem:[%s15] sm:$0x1]
  %v692 = vperm.slane %v690, 0
  %v702 = vunpack.c.l.b16 %v682
  %v703 = vunpack.c.l.b16 %v683
  %v704 = vunpack.c.l.b16 %v684
  %v705 = vunpack.c.l.b16 %v685
  %v706 = vunpack.c.l.b16 %v686
  %v707 = vunpack.c.l.b16 %v687
  %v708 = vunpack.c.l.b16 %v688
  %v709 = vunpack.c.l.b16 %v689
  %v710 = vpack.c.b16 %v703, %v702
  %v711 = vpack.c.b16 %v705, %v704
  %v712 = vpack.c.b16 %v707, %v706
  %v713 = vpack.c.b16 %v709, %v708
  %vm718 = vcmask 523264
  %v720 = vsel %vm718, %v681, 0
  %722 = vmatpush.bf16.msra.mxu0 0
  %723 = vmatpush.bf16.msra.mxu0 0
  %724 = vmatpush.bf16.msra.mxu0 0
  %725 = vmatpush.bf16.msra.mxu0 0
  %726 = vmatpush.bf16.msra.mxu0 %v713
  %727 = vmatpush.bf16.msra.mxu0 %v712
  %728 = vmatpush.bf16.msra.mxu0 %v711
  %729 = vmatpush.bf16.msra.mxu0 %v710
  %730 = vmatmul.bf16.gmra.mxu0 %v720
  %v731 = vpop.f32.mrf.mxu0
  %v732 = vadd.f32 %v692, %v731
  %v733 = vpop.f32.mrf.mxu0
  %v734 = vadd.f32 %v692, %v733
  %735 = vdwg.mxu0
  %v736 = vadd.f32 %v639, %v732
  %v737 = vadd.f32 %v640, %v734
  %s738 = scalar_lea.vmem %s4, 1
  %v739 = vld [vmem:[%s738] sm:$0x1]
  %s740 = scalar_lea.vmem %s5, 1
  %v741 = vld [vmem:[%s740] sm:$0x1]
  %v742 = vsel %vm80, %v736, 0.0
  %743 = vadd.xlane.f32.xlu0 %v742
  %v744 = vpop.xlane.xlu0 %743
  %v745 = vsel %vm80, %v737, 0.0
  %746 = vadd.xlane.f32.xlu0 %v745
  %v747 = vpop.xlane.xlu0 %746
  %v748 = vmul.f32 %v744, %v93
  %v749 = vmul.f32 %v747, %v93
  %v750 = vsub.f32 %v736, %v748
  %v751 = vsub.f32 %v737, %v749
  %v752 = vmul.f32 %v750, %v750
  %v753 = vmul.f32 %v751, %v751
  %v754 = vsel %vm80, %v752, 0.0
  %755 = vadd.xlane.f32.xlu0 %v754
  %v756 = vpop.xlane.xlu0 %755
  %v757 = vsel %vm80, %v753, 0.0
  %758 = vadd.xlane.f32.xlu0 %v757
  %v759 = vpop.xlane.xlu0 %758
  %v760 = vmul.f32 %v756, %v93
  %v761 = vmul.f32 %v759, %v93
  %v762 = vadd.f32 %v760, 1e-05
  %v763 = vadd.f32 %v761, 1e-05
  %v764 = vrsqrt.pop %v762
  %v765 = vmul.f32 %v764, %v762
  %v766 = vmul.f32 %v765, %v764
  %v767 = vmul.f32 0.5, %v766
  %v768 = vsub.f32 1.5, %v767
  %v769 = vmul.f32 %v764, %v768
  %vm770 = vweird.f32 %v762
  %vm771 = vweird.f32 %v764
  %vm772 = vmor %vm770, %vm771
  %v773 = vsel %vm772, %v764, %v769
  %v774 = vrsqrt.pop %v763
  %v775 = vmul.f32 %v774, %v763
  %v776 = vmul.f32 %v775, %v774
  %v777 = vmul.f32 0.5, %v776
  %v778 = vsub.f32 1.5, %v777
  %v779 = vmul.f32 %v774, %v778
  %vm780 = vweird.f32 %v763
  %vm781 = vweird.f32 %v774
  %vm782 = vmor %vm780, %vm781
  %v783 = vsel %vm782, %v774, %v779
  %v784 = vmul.f32 %v750, %v773
  %v785 = vmul.f32 %v751, %v783
  %v787 = vperm.slane %v739, 0
  %v789 = vmul.f32 %v784, %v787
  %v790 = vmul.f32 %v785, %v787
  %v792 = vperm.slane %v741, 0
  %v794 = vadd.f32 %v789, %v792
  %v795 = vadd.f32 %v790, %v792
  %v796 = vpack.c.bf16 %v795, %v794
  %s797 = scalar_lea.vmem %s6, 16
  %v798 = vld [vmem:[%s797] sm:$0xf]
  %v799 = vld [vmem:[%s797 + $0x4] sm:$0xf]
  %v800 = vld [vmem:[%s797 + $0x8] sm:$0xf]
  %v801 = vld [vmem:[%s797 + $0xc] sm:$0xf]
  %s802 = scalar_lea.vmem %s7, 1
  %v803 = vld [vmem:[%s802] sm:$0x1]
  %v805 = vperm.slane %v803, 0
  %v811 = vunpack.c.l.b16 %v798
  %v812 = vunpack.c.l.b16 %v799
  %v813 = vunpack.c.l.b16 %v800
  %v814 = vunpack.c.l.b16 %v801
  %v815 = vpack.c.b16 %v812, %v811
  %v816 = vpack.c.b16 %v814, %v813
  %v820 = vsel %vm80, %v796, 0
  %822 = vmatpush.bf16.msra.mxu0 0
  %823 = vmatpush.bf16.msra.mxu0 0
  %824 = vmatpush.bf16.msra.mxu0 0
  %825 = vmatpush.bf16.msra.mxu0 0
  %826 = vmatpush.bf16.msra.mxu0 0
  %827 = vmatpush.bf16.msra.mxu0 0
  %828 = vmatpush.bf16.msra.mxu0 %v816
  %829 = vmatpush.bf16.msra.mxu0 %v815
  %830 = vmatmul.bf16.gmra.mxu0 %v820
  %v831 = vpop.f32.mrf.mxu0
  %v832 = vadd.f32 %v805, %v831
  %v833 = vpop.f32.mrf.mxu0
  %v834 = vadd.f32 %v805, %v833
  %835 = vdwg.mxu0
  %v836 = vmul.f32 %v832, %v72
  %v837 = vmul.f32 %v834, %v72
  %v838 = vpack.c.bf16 %v834, %v832
  %v840 = vsel %vm80, %v838, 0
  %842 = vmatpush.bf16.msra.mxu0 0
  %843 = vmatpush.bf16.msra.mxu0 0
  %844 = vmatpush.bf16.msra.mxu0 0
  %845 = vmatpush.bf16.msra.mxu0 0
  %846 = vmatpush.bf16.msra.mxu0 0
  %847 = vmatpush.bf16.msra.mxu0 0
  %848 = vmatpush.bf16.msra.mxu0 %v192
  %849 = vmatpush.bf16.msra.mxu0 %v191
  %850 = vmatmul.bf16.gmra.mxu0 %v840
  %v851 = vpop.f32.mrf.mxu0
  %v852 = vadd.f32 0.0, %v851
  %v853 = vpop.f32.mrf.mxu0
  %v854 = vadd.f32 0.0, %v853
  %855 = vdwg.mxu0
  %v856 = vmul.f32 %v852, %v73
  %v857 = vmul.f32 %v854, %v73
  %v858 = vadd.f32 %v836, %v856
  %v859 = vadd.f32 %v837, %v857
  %v860 = vmul.f32 %v858, 0.25
  %v861 = vmul.f32 %v859, 0.25
  %v862 = vmul.f32 %v832, %v220
  %v863 = vmul.f32 %v834, %v220
  %865 = vrot.lane.b32.xlu0 %v838, 96
  %v866 = vpop.permute.xlu0 %865
  %v868 = vsel %vm80, %v866, 0
  %870 = vmatpush.bf16.msra.mxu0 0
  %871 = vmatpush.bf16.msra.mxu0 0
  %872 = vmatpush.bf16.msra.mxu0 0
  %873 = vmatpush.bf16.msra.mxu0 0
  %874 = vmatpush.bf16.msra.mxu0 0
  %875 = vmatpush.bf16.msra.mxu0 0
  %876 = vmatpush.bf16.msra.mxu0 %v192
  %877 = vmatpush.bf16.msra.mxu0 %v191
  %878 = vmatmul.bf16.gmra.mxu0 %v868
  %v879 = vpop.f32.mrf.mxu0
  %v880 = vadd.f32 0.0, %v879
  %v881 = vpop.f32.mrf.mxu0
  %v882 = vadd.f32 0.0, %v881
  %883 = vdwg.mxu0
  %v884 = vmul.f32 %v880, %v73
  %v885 = vmul.f32 %v882, %v73
  %888 = vrot.lane.b32.xlu0 %v884, 32
  %v889 = vpop.permute.xlu0 %888
  %890 = vrot.lane.b32.xlu0 %v885, 32
  %v891 = vpop.permute.xlu0 %890
  %v894 = vadd.f32 %v862, %v889
  %v895 = vadd.f32 %v863, %v891
  %898 = vrot.lane.b32.xlu0 %v860, 112
  %v899 = vpop.permute.xlu0 %898
  %900 = vrot.lane.b32.xlu0 %v861, 112
  %v901 = vpop.permute.xlu0 %900
  %906 = vrot.lane.b32.xlu0 %v894, 112
  %v907 = vpop.permute.xlu0 %906
  %908 = vrot.lane.b32.xlu0 %v895, 112
  %v909 = vpop.permute.xlu0 %908
  %914 = vrot.lane.b32.xlu0 %v832, 112
  %v915 = vpop.permute.xlu0 %914
  %916 = vrot.lane.b32.xlu0 %v834, 112
  %v917 = vpop.permute.xlu0 %916
  %v920 = vpack.c.bf16 %v860, %v860
  %v921 = vpack.c.bf16 %v861, %v861
  %v922 = vpack.c.bf16 %v899, %v899
  %v923 = vpack.c.bf16 %v901, %v901
  %v924 = vpack.c.bf16 %v894, %v894
  %v925 = vpack.c.bf16 %v895, %v895
  %v926 = vpack.c.bf16 %v907, %v907
  %v927 = vpack.c.bf16 %v909, %v909
  %v928 = vpack.c.bf16 %v832, %v832
  %v929 = vpack.c.bf16 %v834, %v834
  %v930 = vpack.c.bf16 %v915, %v915
  %v931 = vpack.c.bf16 %v917, %v917
  %v933 = vunpack.c.l.b16 %v924
  %v934 = vpack.c.b16 %v933, %v933
  %935 = vrot.lane.b32.xlu0 %v934, 96
  %v936 = vpop.permute.xlu0 %935
  %v938 = vsel %vm297, %v920, 0
  %v941 = vsel %vm297, %v936, 0
  %943 = vmatpush.bf16.xpose.msra.mxu0 0
  %944 = vmatpush.bf16.xpose.msra.mxu0 0
  %945 = vmatpush.bf16.xpose.msra.mxu0 0
  %946 = vmatpush.bf16.xpose.msra.mxu0 0
  %947 = vmatpush.bf16.xpose.msra.mxu0 0
  %948 = vmatpush.bf16.xpose.msra.mxu0 0
  %949 = vmatpush.bf16.xpose.msra.mxu0 0
  %950 = vmatpush.bf16.xpose.msra.mxu0 %v941
  %951 = vmatmul.bf16.gmra.mxu0 %v938
  %v952 = vpop.f32.mrf.mxu0
  %v953 = vadd.f32 %v71, %v952
  %v954 = vpop.f32.mrf.mxu0
  %955 = vdwg.mxu0
  %v957 = vunpack.c.l.b16 %v925
  %v958 = vpack.c.b16 %v957, %v957
  %959 = vrot.lane.b32.xlu0 %v958, 96
  %v960 = vpop.permute.xlu0 %959
  %v962 = vsel %vm297, %v921, 0
  %v965 = vsel %vm297, %v960, 0
  %967 = vmatpush.bf16.xpose.msra.mxu0 0
  %968 = vmatpush.bf16.xpose.msra.mxu0 0
  %969 = vmatpush.bf16.xpose.msra.mxu0 0
  %970 = vmatpush.bf16.xpose.msra.mxu0 0
  %971 = vmatpush.bf16.xpose.msra.mxu0 0
  %972 = vmatpush.bf16.xpose.msra.mxu0 0
  %973 = vmatpush.bf16.xpose.msra.mxu0 0
  %974 = vmatpush.bf16.xpose.msra.mxu0 %v965
  %975 = vmatmul.bf16.gmra.mxu0 %v962
  %v976 = vpop.f32.mrf.mxu0
  %v977 = vadd.f32 %v71, %v976
  %v978 = vpop.f32.mrf.mxu0
  %979 = vdwg.mxu0
  %v981 = vunpack.c.l.b16 %v926
  %v982 = vpack.c.b16 %v981, %v981
  %983 = vrot.lane.b32.xlu0 %v982, 96
  %v984 = vpop.permute.xlu0 %983
  %v986 = vsel %vm297, %v922, 0
  %v989 = vsel %vm297, %v984, 0
  %991 = vmatpush.bf16.xpose.msra.mxu0 0
  %992 = vmatpush.bf16.xpose.msra.mxu0 0
  %993 = vmatpush.bf16.xpose.msra.mxu0 0
  %994 = vmatpush.bf16.xpose.msra.mxu0 0
  %995 = vmatpush.bf16.xpose.msra.mxu0 0
  %996 = vmatpush.bf16.xpose.msra.mxu0 0
  %997 = vmatpush.bf16.xpose.msra.mxu0 0
  %998 = vmatpush.bf16.xpose.msra.mxu0 %v989
  %999 = vmatmul.bf16.gmra.mxu0 %v986
  %v1000 = vpop.f32.mrf.mxu0
  %v1001 = vadd.f32 %v71, %v1000
  %v1002 = vpop.f32.mrf.mxu0
  %1003 = vdwg.mxu0
  %v1005 = vunpack.c.l.b16 %v927
  %v1006 = vpack.c.b16 %v1005, %v1005
  %1007 = vrot.lane.b32.xlu0 %v1006, 96
  %v1008 = vpop.permute.xlu0 %1007
  %v1010 = vsel %vm297, %v923, 0
  %v1013 = vsel %vm297, %v1008, 0
  %1015 = vmatpush.bf16.xpose.msra.mxu0 0
  %1016 = vmatpush.bf16.xpose.msra.mxu0 0
  %1017 = vmatpush.bf16.xpose.msra.mxu0 0
  %1018 = vmatpush.bf16.xpose.msra.mxu0 0
  %1019 = vmatpush.bf16.xpose.msra.mxu0 0
  %1020 = vmatpush.bf16.xpose.msra.mxu0 0
  %1021 = vmatpush.bf16.xpose.msra.mxu0 0
  %1022 = vmatpush.bf16.xpose.msra.mxu0 %v1013
  %1023 = vmatmul.bf16.gmra.mxu0 %v1010
  %v1024 = vpop.f32.mrf.mxu0
  %v1025 = vadd.f32 %v71, %v1024
  %v1026 = vpop.f32.mrf.mxu0
  %1027 = vdwg.mxu0
  %v1028 = vsel %vm389, %v953, -inf
  %1029 = vmax.xlane.f32.xlu0 %v1028
  %v1030 = vpop.xlane.xlu0 %1029
  %v1031 = vsel %vm389, %v977, -inf
  %1032 = vmax.xlane.f32.xlu0 %v1031
  %v1033 = vpop.xlane.xlu0 %1032
  %v1034 = vsel %vm389, %v1001, -inf
  %1035 = vmax.xlane.f32.xlu0 %v1034
  %v1036 = vpop.xlane.xlu0 %1035
  %v1037 = vsel %vm389, %v1025, -inf
  %1038 = vmax.xlane.f32.xlu0 %v1037
  %v1039 = vpop.xlane.xlu0 %1038
  %v1040 = vsub.f32 %v953, %v1030
  %v1041 = vsub.f32 %v977, %v1033
  %v1042 = vsub.f32 %v1001, %v1036
  %v1043 = vsub.f32 %v1025, %v1039
  %v1044 = vmul.f32 %v1040, 1.442695
  %v1045 = vpow.pop %v1044
  %v1046 = vmul.f32 %v1041, 1.442695
  %v1047 = vpow.pop %v1046
  %v1048 = vmul.f32 %v1042, 1.442695
  %v1049 = vpow.pop %v1048
  %v1050 = vmul.f32 %v1043, 1.442695
  %v1051 = vpow.pop %v1050
  %v1052 = vsel %vm389, %v1045, 0.0
  %1053 = vadd.xlane.f32.xlu0 %v1052
  %v1054 = vpop.xlane.xlu0 %1053
  %v1055 = vsel %vm389, %v1047, 0.0
  %1056 = vadd.xlane.f32.xlu0 %v1055
  %v1057 = vpop.xlane.xlu0 %1056
  %v1058 = vsel %vm389, %v1049, 0.0
  %1059 = vadd.xlane.f32.xlu0 %v1058
  %v1060 = vpop.xlane.xlu0 %1059
  %v1061 = vsel %vm389, %v1051, 0.0
  %1062 = vadd.xlane.f32.xlu0 %v1061
  %v1063 = vpop.xlane.xlu0 %1062
  %v1064 = vrcp.pop %v1054
  %v1065 = vrcp.pop %v1057
  %v1066 = vrcp.pop %v1060
  %v1067 = vrcp.pop %v1063
  %v1068 = vmul.f32 %v1045, %v1064
  %v1069 = vmul.f32 %v1047, %v1065
  %v1070 = vmul.f32 %v1049, %v1066
  %v1071 = vmul.f32 %v1051, %v1067
  %v1072 = vpack.c.bf16 %v1068, %v1068
  %v1073 = vpack.c.bf16 %v1069, %v1069
  %v1074 = vpack.c.bf16 %v1070, %v1070
  %v1075 = vpack.c.bf16 %v1071, %v1071
  %v1077 = vunpack.c.l.b16 %v928
  %v1078 = vpack.c.b16 %v1077, %v1077
  %1079 = vrot.lane.b32.xlu0 %v1078, 64
  %v1080 = vpop.permute.xlu0 %1079
  %v1082 = vsel %vm389, %v1072, 0
  %v1085 = vsel %vm446, %v1080, 0
  %1087 = vmatpush.bf16.msra.mxu0 0
  %1088 = vmatpush.bf16.msra.mxu0 0
  %1089 = vmatpush.bf16.msra.mxu0 0
  %1090 = vmatpush.bf16.msra.mxu0 0
  %1091 = vmatpush.bf16.msra.mxu0 0
  %1092 = vmatpush.bf16.msra.mxu0 0
  %1093 = vmatpush.bf16.msra.mxu0 0
  %1094 = vmatpush.bf16.msra.mxu0 %v1085
  %1095 = vmatmul.bf16.gmra.mxu0 %v1082
  %v1096 = vpop.f32.mrf.mxu0
  %v1097 = vadd.f32 0.0, %v1096
  %v1098 = vpop.f32.mrf.mxu0
  %1099 = vdwg.mxu0
  %v1101 = vunpack.c.l.b16 %v929
  %v1102 = vpack.c.b16 %v1101, %v1101
  %1103 = vrot.lane.b32.xlu0 %v1102, 64
  %v1104 = vpop.permute.xlu0 %1103
  %v1106 = vsel %vm389, %v1073, 0
  %v1109 = vsel %vm446, %v1104, 0
  %1111 = vmatpush.bf16.msra.mxu0 0
  %1112 = vmatpush.bf16.msra.mxu0 0
  %1113 = vmatpush.bf16.msra.mxu0 0
  %1114 = vmatpush.bf16.msra.mxu0 0
  %1115 = vmatpush.bf16.msra.mxu0 0
  %1116 = vmatpush.bf16.msra.mxu0 0
  %1117 = vmatpush.bf16.msra.mxu0 0
  %1118 = vmatpush.bf16.msra.mxu0 %v1109
  %1119 = vmatmul.bf16.gmra.mxu0 %v1106
  %v1120 = vpop.f32.mrf.mxu0
  %v1121 = vadd.f32 0.0, %v1120
  %v1122 = vpop.f32.mrf.mxu0
  %1123 = vdwg.mxu0
  %v1125 = vunpack.c.l.b16 %v930
  %v1126 = vpack.c.b16 %v1125, %v1125
  %1127 = vrot.lane.b32.xlu0 %v1126, 64
  %v1128 = vpop.permute.xlu0 %1127
  %v1130 = vsel %vm389, %v1074, 0
  %v1133 = vsel %vm446, %v1128, 0
  %1135 = vmatpush.bf16.msra.mxu0 0
  %1136 = vmatpush.bf16.msra.mxu0 0
  %1137 = vmatpush.bf16.msra.mxu0 0
  %1138 = vmatpush.bf16.msra.mxu0 0
  %1139 = vmatpush.bf16.msra.mxu0 0
  %1140 = vmatpush.bf16.msra.mxu0 0
  %1141 = vmatpush.bf16.msra.mxu0 0
  %1142 = vmatpush.bf16.msra.mxu0 %v1133
  %1143 = vmatmul.bf16.gmra.mxu0 %v1130
  %v1144 = vpop.f32.mrf.mxu0
  %v1145 = vadd.f32 0.0, %v1144
  %v1146 = vpop.f32.mrf.mxu0
  %1147 = vdwg.mxu0
  %v1149 = vunpack.c.l.b16 %v931
  %v1150 = vpack.c.b16 %v1149, %v1149
  %1151 = vrot.lane.b32.xlu0 %v1150, 64
  %v1152 = vpop.permute.xlu0 %1151
  %v1154 = vsel %vm389, %v1075, 0
  %v1157 = vsel %vm446, %v1152, 0
  %1159 = vmatpush.bf16.msra.mxu0 0
  %1160 = vmatpush.bf16.msra.mxu0 0
  %1161 = vmatpush.bf16.msra.mxu0 0
  %1162 = vmatpush.bf16.msra.mxu0 0
  %1163 = vmatpush.bf16.msra.mxu0 0
  %1164 = vmatpush.bf16.msra.mxu0 0
  %1165 = vmatpush.bf16.msra.mxu0 0
  %1166 = vmatpush.bf16.msra.mxu0 %v1157
  %1167 = vmatmul.bf16.gmra.mxu0 %v1154
  %v1168 = vpop.f32.mrf.mxu0
  %v1169 = vadd.f32 0.0, %v1168
  %v1170 = vpop.f32.mrf.mxu0
  %1171 = vdwg.mxu0
  %1174 = vrot.lane.b32.xlu0 %v1145, 16
  %v1175 = vpop.permute.xlu0 %1174
  %1176 = vrot.lane.b32.xlu0 %v1169, 16
  %v1177 = vpop.permute.xlu0 %1176
  %v1180 = vsel %vm297, %v1097, %v1175
  %v1181 = vsel %vm297, %v1121, %v1177
  %v1182 = vpack.c.bf16 %v1181, %v1180
  %s1183 = scalar_lea.vmem %s8, 16
  %v1184 = vld [vmem:[%s1183] sm:$0xf]
  %v1185 = vld [vmem:[%s1183 + $0x4] sm:$0xf]
  %v1186 = vld [vmem:[%s1183 + $0x8] sm:$0xf]
  %v1187 = vld [vmem:[%s1183 + $0xc] sm:$0xf]
  %s1188 = scalar_lea.vmem %s9, 1
  %v1189 = vld [vmem:[%s1188] sm:$0x1]
  %v1191 = vperm.slane %v1189, 0
  %v1197 = vunpack.c.l.b16 %v1184
  %v1198 = vunpack.c.l.b16 %v1185
  %v1199 = vunpack.c.l.b16 %v1186
  %v1200 = vunpack.c.l.b16 %v1187
  %v1201 = vpack.c.b16 %v1198, %v1197
  %v1202 = vpack.c.b16 %v1200, %v1199
  %v1206 = vsel %vm80, %v1182, 0
  %1208 = vmatpush.bf16.msra.mxu0 0
  %1209 = vmatpush.bf16.msra.mxu0 0
  %1210 = vmatpush.bf16.msra.mxu0 0
  %1211 = vmatpush.bf16.msra.mxu0 0
  %1212 = vmatpush.bf16.msra.mxu0 0
  %1213 = vmatpush.bf16.msra.mxu0 0
  %1214 = vmatpush.bf16.msra.mxu0 %v1202
  %1215 = vmatpush.bf16.msra.mxu0 %v1201
  %1216 = vmatmul.bf16.gmra.mxu0 %v1206
  %v1217 = vpop.f32.mrf.mxu0
  %v1218 = vadd.f32 %v1191, %v1217
  %v1219 = vpop.f32.mrf.mxu0
  %v1220 = vadd.f32 %v1191, %v1219
  %1221 = vdwg.mxu0
  %v1222 = vadd.f32 %v794, %v1218
  %v1223 = vadd.f32 %v795, %v1220
  %s1224 = scalar_lea.vmem %s10, 1
  %v1225 = vld [vmem:[%s1224] sm:$0x1]
  %s1226 = scalar_lea.vmem %s11, 1
  %v1227 = vld [vmem:[%s1226] sm:$0x1]
  %v1228 = vsel %vm80, %v1222, 0.0
  %1229 = vadd.xlane.f32.xlu0 %v1228
  %v1230 = vpop.xlane.xlu0 %1229
  %v1231 = vsel %vm80, %v1223, 0.0
  %1232 = vadd.xlane.f32.xlu0 %v1231
  %v1233 = vpop.xlane.xlu0 %1232
  %v1234 = vmul.f32 %v1230, %v93
  %v1235 = vmul.f32 %v1233, %v93
  %v1236 = vsub.f32 %v1222, %v1234
  %v1237 = vsub.f32 %v1223, %v1235
  %v1238 = vmul.f32 %v1236, %v1236
  %v1239 = vmul.f32 %v1237, %v1237
  %v1240 = vsel %vm80, %v1238, 0.0
  %1241 = vadd.xlane.f32.xlu0 %v1240
  %v1242 = vpop.xlane.xlu0 %1241
  %v1243 = vsel %vm80, %v1239, 0.0
  %1244 = vadd.xlane.f32.xlu0 %v1243
  %v1245 = vpop.xlane.xlu0 %1244
  %v1246 = vmul.f32 %v1242, %v93
  %v1247 = vmul.f32 %v1245, %v93
  %v1248 = vadd.f32 %v1246, 1e-05
  %v1249 = vadd.f32 %v1247, 1e-05
  %v1250 = vrsqrt.pop %v1248
  %v1251 = vmul.f32 %v1250, %v1248
  %v1252 = vmul.f32 %v1251, %v1250
  %v1253 = vmul.f32 0.5, %v1252
  %v1254 = vsub.f32 1.5, %v1253
  %v1255 = vmul.f32 %v1250, %v1254
  %vm1256 = vweird.f32 %v1248
  %vm1257 = vweird.f32 %v1250
  %vm1258 = vmor %vm1256, %vm1257
  %v1259 = vsel %vm1258, %v1250, %v1255
  %v1260 = vrsqrt.pop %v1249
  %v1261 = vmul.f32 %v1260, %v1249
  %v1262 = vmul.f32 %v1261, %v1260
  %v1263 = vmul.f32 0.5, %v1262
  %v1264 = vsub.f32 1.5, %v1263
  %v1265 = vmul.f32 %v1260, %v1264
  %vm1266 = vweird.f32 %v1249
  %vm1267 = vweird.f32 %v1260
  %vm1268 = vmor %vm1266, %vm1267
  %v1269 = vsel %vm1268, %v1260, %v1265
  %v1270 = vmul.f32 %v1236, %v1259
  %v1271 = vmul.f32 %v1237, %v1269
  %v1273 = vperm.slane %v1225, 0
  %v1275 = vmul.f32 %v1270, %v1273
  %v1276 = vmul.f32 %v1271, %v1273
  %v1278 = vperm.slane %v1227, 0
  %v1280 = vadd.f32 %v1275, %v1278
  %v1281 = vadd.f32 %v1276, %v1278
  %v1282 = vpack.c.bf16 %v1281, %v1280
  %s1283 = scalar_lea.vmem %s12, 16
  %v1284 = vld [vmem:[%s1283] sm:$0xf]
  %v1285 = vld [vmem:[%s1283 + $0x4] sm:$0xf]
  %v1286 = vld [vmem:[%s1283 + $0x8] sm:$0xf]
  %v1287 = vld [vmem:[%s1283 + $0xc] sm:$0xf]
  %s1288 = scalar_lea.vmem %s13, 1
  %v1289 = vld [vmem:[%s1288] sm:$0x1]
  %v1291 = vperm.slane %v1289, 0
  %v1297 = vunpack.c.l.b16 %v1284
  %v1298 = vunpack.c.l.b16 %v1285
  %v1299 = vunpack.c.l.b16 %v1286
  %v1300 = vunpack.c.l.b16 %v1287
  %v1301 = vpack.c.b16 %v1298, %v1297
  %v1302 = vpack.c.b16 %v1300, %v1299
  %v1306 = vsel %vm80, %v1282, 0
  %1308 = vmatpush.bf16.msra.mxu0 0
  %1309 = vmatpush.bf16.msra.mxu0 0
  %1310 = vmatpush.bf16.msra.mxu0 0
  %1311 = vmatpush.bf16.msra.mxu0 0
  %1312 = vmatpush.bf16.msra.mxu0 0
  %1313 = vmatpush.bf16.msra.mxu0 0
  %1314 = vmatpush.bf16.msra.mxu0 %v1302
  %1315 = vmatpush.bf16.msra.mxu0 %v1301
  %1316 = vmatmul.bf16.gmra.mxu0 %v1306
  %v1317 = vpop.f32.mrf.mxu0
  %v1318 = vadd.f32 %v1291, %v1317
  %v1319 = vpop.f32.mrf.mxu0
  %v1320 = vadd.f32 %v1291, %v1319
  %1321 = vdwg.mxu0
  %v1322 = vmax.f32 %v1318, 0.0
  %v1323 = vmax.f32 %v1320, 0.0
  %v1324 = vpack.c.bf16 %v1323, %v1322
  %s1325 = scalar_lea.vmem %s14, 32
  %v1326 = vld [vmem:[%s1325] sm:$0xf]
  %v1327 = vld [vmem:[%s1325 + $0x4] sm:$0xf]
  %v1328 = vld [vmem:[%s1325 + $0x8] sm:$0xf]
  %v1329 = vld [vmem:[%s1325 + $0xc] sm:$0xf]
  %v1330 = vld [vmem:[%s1325 + $0x10] sm:$0xf]
  %v1331 = vld [vmem:[%s1325 + $0x14] sm:$0xf]
  %v1332 = vld [vmem:[%s1325 + $0x18] sm:$0xf]
  %v1333 = vld [vmem:[%s1325 + $0x1c] sm:$0xf]
  %s1334 = scalar_lea.vmem %s15, 1
  %v1335 = vld [vmem:[%s1334] sm:$0x1]
  %v1337 = vperm.slane %v1335, 0
  %v1347 = vunpack.c.l.b16 %v1326
  %v1348 = vunpack.c.l.b16 %v1327
  %v1349 = vunpack.c.l.b16 %v1328
  %v1350 = vunpack.c.l.b16 %v1329
  %v1351 = vunpack.c.l.b16 %v1330
  %v1352 = vunpack.c.l.b16 %v1331
  %v1353 = vunpack.c.l.b16 %v1332
  %v1354 = vunpack.c.l.b16 %v1333
  %v1355 = vpack.c.b16 %v1348, %v1347
  %v1356 = vpack.c.b16 %v1350, %v1349
  %v1357 = vpack.c.b16 %v1352, %v1351
  %v1358 = vpack.c.b16 %v1354, %v1353
  %v1364 = vsel %vm718, %v1324, 0
  %1366 = vmatpush.bf16.msra.mxu0 0
  %1367 = vmatpush.bf16.msra.mxu0 0
  %1368 = vmatpush.bf16.msra.mxu0 0
  %1369 = vmatpush.bf16.msra.mxu0 0
  %1370 = vmatpush.bf16.msra.mxu0 %v1358
  %1371 = vmatpush.bf16.msra.mxu0 %v1357
  %1372 = vmatpush.bf16.msra.mxu0 %v1356
  %1373 = vmatpush.bf16.msra.mxu0 %v1355
  %1374 = vmatmul.bf16.gmra.mxu0 %v1364
  %v1375 = vpop.f32.mrf.mxu0
  %v1376 = vadd.f32 %v1337, %v1375
  %v1377 = vpop.f32.mrf.mxu0
  %v1378 = vadd.f32 %v1337, %v1377
  %1379 = vdwg.mxu0
  %v1380 = vadd.f32 %v1280, %v1376
  %v1381 = vadd.f32 %v1281, %v1378
  %v1382 = vld [vmem:[%s16] sm:$0x1]
  %v1383 = vld [vmem:[%s17] sm:$0x1]
  %v1384 = vsel %vm80, %v1380, 0.0
  %1385 = vadd.xlane.f32.xlu0 %v1384
  %v1386 = vpop.xlane.xlu0 %1385
  %v1387 = vsel %vm80, %v1381, 0.0
  %1388 = vadd.xlane.f32.xlu0 %v1387
  %v1389 = vpop.xlane.xlu0 %1388
  %v1390 = vmul.f32 %v1386, %v93
  %v1391 = vmul.f32 %v1389, %v93
  %v1392 = vsub.f32 %v1380, %v1390
  %v1393 = vsub.f32 %v1381, %v1391
  %v1394 = vmul.f32 %v1392, %v1392
  %v1395 = vmul.f32 %v1393, %v1393
  %v1396 = vsel %vm80, %v1394, 0.0
  %1397 = vadd.xlane.f32.xlu0 %v1396
  %v1398 = vpop.xlane.xlu0 %1397
  %v1399 = vsel %vm80, %v1395, 0.0
  %1400 = vadd.xlane.f32.xlu0 %v1399
  %v1401 = vpop.xlane.xlu0 %1400
  %v1402 = vmul.f32 %v1398, %v93
  %v1403 = vmul.f32 %v1401, %v93
  %v1404 = vadd.f32 %v1402, 1e-05
  %v1405 = vadd.f32 %v1403, 1e-05
  %v1406 = vrsqrt.pop %v1404
  %v1407 = vmul.f32 %v1406, %v1404
  %v1408 = vmul.f32 %v1407, %v1406
  %v1409 = vmul.f32 0.5, %v1408
  %v1410 = vsub.f32 1.5, %v1409
  %v1411 = vmul.f32 %v1406, %v1410
  %vm1412 = vweird.f32 %v1404
  %vm1413 = vweird.f32 %v1406
  %vm1414 = vmor %vm1412, %vm1413
  %v1415 = vsel %vm1414, %v1406, %v1411
  %v1416 = vrsqrt.pop %v1405
  %v1417 = vmul.f32 %v1416, %v1405
  %v1418 = vmul.f32 %v1417, %v1416
  %v1419 = vmul.f32 0.5, %v1418
  %v1420 = vsub.f32 1.5, %v1419
  %v1421 = vmul.f32 %v1416, %v1420
  %vm1422 = vweird.f32 %v1405
  %vm1423 = vweird.f32 %v1416
  %vm1424 = vmor %vm1422, %vm1423
  %v1425 = vsel %vm1424, %v1416, %v1421
  %v1426 = vmul.f32 %v1392, %v1415
  %v1427 = vmul.f32 %v1393, %v1425
  %v1429 = vperm.slane %v1382, 0
  %v1431 = vmul.f32 %v1426, %v1429
  %v1432 = vmul.f32 %v1427, %v1429
  %v1434 = vperm.slane %v1383, 0
  %v1436 = vadd.f32 %v1431, %v1434
  %v1437 = vadd.f32 %v1432, %v1434
  %v1438 = vpack.c.bf16 %v1437, %v1436
  %v1439 = vld [vmem:[%s18] sm:$0xf]
  %v1440 = vld [vmem:[%s18 + $0x4] sm:$0xf]
  %v1441 = vld [vmem:[%s18 + $0x8] sm:$0xf]
  %v1442 = vld [vmem:[%s18 + $0xc] sm:$0xf]
  %v1447 = vunpack.c.l.b16 %v1439
  %v1448 = vunpack.c.l.b16 %v1440
  %v1449 = vunpack.c.l.b16 %v1441
  %v1450 = vunpack.c.l.b16 %v1442
  %v1451 = vpack.c.b16 %v1448, %v1447
  %v1452 = vpack.c.b16 %v1450, %v1449
  %v1456 = vsel %vm80, %v1438, 0
  %1458 = vmatpush.bf16.msra.mxu0 0
  %1459 = vmatpush.bf16.msra.mxu0 0
  %1460 = vmatpush.bf16.msra.mxu0 0
  %1461 = vmatpush.bf16.msra.mxu0 0
  %1462 = vmatpush.bf16.msra.mxu0 0
  %1463 = vmatpush.bf16.msra.mxu0 0
  %1464 = vmatpush.bf16.msra.mxu0 %v1452
  %1465 = vmatpush.bf16.msra.mxu0 %v1451
  %1466 = vmatmul.bf16.gmra.mxu0 %v1456
  %v1467 = vpop.f32.mrf.mxu0
  %v1468 = vadd.f32 0.0, %v1467
  %v1469 = vpop.f32.mrf.mxu0
  %v1470 = vadd.f32 0.0, %v1469
  %1471 = vdwg.mxu0
  %1472 = vst [vmem:[%s19] sm:$0xff] %v1468
  %1473 = vst [vmem:[%s19 + $0x8] sm:$0xff] %v1470
  // Predicated region
  $region78: #{transformer_forward.1} parent=0 // pred_check
    _
  $region79: #{transformer_forward.1} parent=0 // pred_check_branch
    %1475 = sbr.rel (0) target = $region81
  $region80: #{transformer_forward.1} parent=0 // pred_region
    _
  $region81: #{transformer_forward.1} parent=0 // pred_fallthru
    _
  // Predicated region
  $region82: #{transformer_forward.1} parent=0 // pred_check
    _
  $region83: #{transformer_forward.1} parent=0 // pred_check_branch
    %1477 = sbr.rel (0) target = $region85
  $region84: #{transformer_forward.1} parent=0 // pred_region
    _
  $region85: #{transformer_forward.1} parent=0 // pred_fallthru
    _

</llo_original>
